<compile_context>
chip_gen: v5e
topology: v5e:2x2
jax: 0.10.0
libtpu: 0.0.40
codegen_flags: <defaults>
</compile_context>

<pallas_src>
import functools

import jax
import jax.numpy as jnp
from jax.experimental import pallas as pl
from jax.experimental.pallas import tpu as pltpu


def _pick_tile(dim, target, unit):
    """Largest multiple of `unit` that divides `dim` and is <= `target`, else `dim`."""
    if dim <= target:
        return dim
    t = (target // unit) * unit
    while t >= unit:
        if dim % t == 0:
            return t
        t -= unit
    return dim


# ------------------------- fused per-layer Mamba block ------------------------

def _layer_kernel(Dm, Din, N, NP, R, Kc, eps, has_residual, *refs):
    refs = list(refs)
    h_ref = refs.pop(0)
    r_ref = refs.pop(0) if has_residual else None
    (nw_ref, nb_ref, inw_ref, convw_ref, convb_ref, wbig_ref, posA_ref,
     D_ref, dtb_ref, outw_ref, y_ref, res_ref,
     h_s, tail_s, dA_s, dbu_s, hall_s) = refs

    TL = h_ref.shape[1]
    lc = pl.program_id(1)

    @pl.when(lc == 0)
    def _():                                    # new batch row: reset carried state
        h_s[...] = jnp.zeros_like(h_s)
        tail_s[...] = jnp.zeros_like(tail_s)    # causal left padding of the conv

    # ---- fused residual add + LayerNorm (prenorm Block) ----
    h = h_ref[0]                                # (TL, Dm)
    res = h + r_ref[0] if has_residual else h
    res_ref[0] = res
    mu = jnp.mean(res, axis=-1, keepdims=True)
    var = jnp.mean(jnp.square(res - mu), axis=-1, keepdims=True)
    hs = (res - mu) * jax.lax.rsqrt(var + eps) * nw_ref[...] + nb_ref[...]

    # ---- in_proj (bf16 MXU operands, f32 accumulate) ----
    xz = jnp.dot(hs.astype(inw_ref.dtype), inw_ref[...],
                 preferred_element_type=jnp.float32)        # (TL, 2*Din)
    x = xz[:, :Din]
    z = xz[:, Din:]

    # ---- causal depthwise conv1d + SiLU (tail carried across L-chunks) ----
    xext = jnp.concatenate([tail_s[...], x], axis=0)        # (TL + Kc - 1, Din)
    tail_s[...] = x[TL - (Kc - 1):, :]                      # tail for next chunk
    acc = jnp.zeros((TL, Din), jnp.float32) + convb_ref[...]
    w = convw_ref[...]
    for k in range(Kc):                                     # static unroll, Kc = d_conv
        acc = acc + xext[k:k + TL, :] * w[k:k + 1, :]
    xc = acc * jax.nn.sigmoid(acc)                          # SiLU; this is `u`

    # ---- x_proj with dt_proj folded in: one matmul -> [delta | B | C] ----
    dbl = jnp.dot(xc.astype(wbig_ref.dtype), wbig_ref[...],
                  preferred_element_type=jnp.float32)       # (TL, Din + 2N)
    dl = jax.nn.softplus(dbl[:, :Din] + dtb_ref[...])       # (TL, Din)
    du = dl * xc

    # ---- hoisted, lane-packed scan inputs; packed state layout (NP, R*Din):
    #      lane block j of packed row p holds state n = p*R + j ----
    dl_rep = jnp.concatenate([dl] * R, axis=-1) if R > 1 else dl
    dA_s[...] = jnp.exp(-(dl_rep[:, None, :] * posA_ref[...][None]))
    parts = []
    for j in range(R):
        Bj = dbl[:, Din + j * NP:Din + (j + 1) * NP]        # (TL, NP)
        parts.append(Bj[:, :, None] * du[:, None, :])       # (TL, NP, Din)
    dbu_s[...] = jnp.concatenate(parts, axis=-1) if R > 1 else parts[0]

    # ---- serial recurrence: one FMA + history store per step, unrolled x8 ----
    def body(t, hcur):
        hnew = dA_s[t] * hcur + dbu_s[t]
        hall_s[t] = hnew
        return hnew

    h_s[...] = jax.lax.fori_loop(0, TL, body, h_s[...], unroll=8)

    # ---- vectorized epilogue: C contraction, D skip, SiLU(z) gate, out_proj ----
    hall = hall_s[...]                                      # (TL, NP, R*Din)
    y = jnp.zeros((TL, Din), jnp.float32)
    for j in range(R):
        Cj = dbl[:, Din + N + j * NP:Din + N + (j + 1) * NP]
        y = y + jnp.sum(hall[:, :, j * Din:(j + 1) * Din] * Cj[:, :, None], axis=1)
    y = (y + xc * D_ref[...]) * (z * jax.nn.sigmoid(z))
    y_ref[0] = jnp.dot(y.astype(outw_ref.dtype), outw_ref[...],
                       preferred_element_type=jnp.float32)


def mamba_block(h, residual, lp, max_chunk=256):
    """residual' = h + residual (or h); hidden' = Mamba(LN(residual'))."""
    B, L, Dm = h.shape
    Din = lp['D'].shape[-1]
    N, R, NP = lp['d_state'], lp['R'], lp['NP']
    Kc = lp['conv_w'].shape[0]
    LW = R * Din
    TL = _pick_tile(L, max_chunk, 8)            # L is a multiple of 8 (wrapper pads)

    has_res = residual is not None
    kern = functools.partial(_layer_kernel, Dm, Din, N, NP, R, Kc, 1e-5, has_res)

    def hspec():
        return pl.BlockSpec((1, TL, Dm), lambda b, lc: (b, lc, 0))

    def wspec(a):
        return pl.BlockSpec(a.shape, lambda b, lc: (0, 0))

    weights = [lp['norm_w'], lp['norm_b'], lp['in_proj_wT'], lp['conv_w'],
               lp['conv_b'], lp['w_big'], lp['posA'], lp['D'], lp['dt_bias'],
               lp['out_proj_wT']]
    in_specs = [hspec()] + ([hspec()] if has_res else []) + [wspec(a) for a in weights]
    args = [h] + ([residual] if has_res else []) + weights

    y, res = pl.pallas_call(
        kern,
        out_shape=(jax.ShapeDtypeStruct((B, L, Dm), jnp.float32),
                   jax.ShapeDtypeStruct((B, L, Dm), jnp.float32)),
        grid_spec=pltpu.PrefetchScalarGridSpec(
            num_scalar_prefetch=0,
            grid=(B, L // TL),
            in_specs=in_specs,
            out_specs=(hspec(), hspec()),
            scratch_shapes=[
                pltpu.VMEM((NP, LW), jnp.float32),          # SSM state carry (packed)
                pltpu.VMEM((Kc - 1, Din), jnp.float32),     # conv tail carry
                pltpu.VMEM((TL, NP, LW), jnp.float32),      # exp(dt * A), packed
                pltpu.VMEM((TL, NP, LW), jnp.float32),      # dt * B * u, packed
                pltpu.VMEM((TL, NP, LW), jnp.float32),      # per-chunk state history
            ]),
        compiler_params=pltpu.CompilerParams(
            dimension_semantics=("parallel", "arbitrary")),
    )(*args)
    return y, res


# ------------------- fused final add + LayerNorm + lm_head --------------------

def _head_kernel(eps, h_ref, r_ref, nw_ref, nb_ref, w_ref, o_ref):
    res = h_ref[...] + r_ref[...]
    mu = jnp.mean(res, axis=-1, keepdims=True)
    var = jnp.mean(jnp.square(res - mu), axis=-1, keepdims=True)
    hs = (res - mu) * jax.lax.rsqrt(var + eps) * nw_ref[...] + nb_ref[...]
    o_ref[...] = jnp.dot(hs.astype(w_ref.dtype), w_ref[...],
                         preferred_element_type=jnp.float32)


def lm_head(h, residual, norm_w, norm_b, wT, eps=1e-5):
    B, L, Dm = h.shape
    M = B * L
    Vp = wT.shape[1]                            # 128-padded vocab (lane-dense store)
    TM = _pick_tile(M, 512, 8)
    TN = _pick_tile(Vp, 512, 128)
    out = pl.pallas_call(
        functools.partial(_head_kernel, eps),
        out_shape=jax.ShapeDtypeStruct((M, Vp), jnp.float32),
        grid_spec=pltpu.PrefetchScalarGridSpec(
            num_scalar_prefetch=0,
            grid=(M // TM, Vp // TN),
            in_specs=[pl.BlockSpec((TM, Dm), lambda i, j: (i, 0)),
                      pl.BlockSpec((TM, Dm), lambda i, j: (i, 0)),
                      pl.BlockSpec((1, Dm), lambda i, j: (0, 0)),
                      pl.BlockSpec((1, Dm), lambda i, j: (0, 0)),
                      pl.BlockSpec((Dm, TN), lambda i, j: (0, j))],
            out_specs=pl.BlockSpec((TM, TN), lambda i, j: (i, j)),
        ),
        compiler_params=pltpu.CompilerParams(
            dimension_semantics=("parallel", "parallel")),
    )(h.reshape(M, Dm), residual.reshape(M, Dm), norm_w, norm_b, wT)
    return out.reshape(B, L, Vp)


# --------------------------- one-time parameter prep --------------------------

def real_eigenval(X, dt_rank, d_state):
    """RealEigenval parametrization of x_proj.weight -> (SD, SB, SC) row blocks."""
    d_inner = X.shape[1]
    SD = X[:dt_rank]
    P = X[dt_rank:dt_rank + d_state]
    diag = X[-d_state:, :1]                                 # (d_state, 1)
    diag_sp = jax.nn.softplus(diag)
    sign = jnp.where(jnp.arange(d_state) < d_state // 2, 1.0, -1.0)[:, None]
    rows = jnp.arange(d_state)[:, None]
    cols = jnp.arange(d_inner)[None, :]
    P1 = jnp.where(cols >= rows + 1, P, 0.0)                # triu(diagonal=1)
    P1 = jnp.where(cols == rows, 1.0, P1)                   # fill_diagonal_(1)
    SC = P1
    SB = sign * diag_sp * P1
    return SD, SB, SC


def _prepare_layer(raw, dt_rank, d_state):
    """Hoisted per-forward work: RealEigenval, exp(A_log), weight transposes/casts,
    delta = xc @ (dt_proj_w @ SD).T fusion, and lane-packing of the SSM state."""
    Din = raw['A_log'].shape[0]
    N = d_state
    SD, SB, SC = real_eigenval(raw['x_proj_w_raw'], dt_rank, d_state)

    # pack R states per 128-lane row (R=2 for d_inner=64, d_state=16)
    R = 1
    while (2 * R) * Din <= 128 and N % (2 * R) == 0:
        R *= 2
    NP = N // R
    perm = jnp.arange(N).reshape(NP, R).T.reshape(-1)       # perm[j*NP + p] = p*R + j

    w_delta = (raw['dt_proj_w'] @ SD).T                     # (Din, Din)
    w_big = jnp.concatenate([w_delta, SB[perm].T, SC[perm].T], axis=1)  # (Din, Din+2N)
    posA = jnp.exp(raw['A_log']).T.reshape(NP, R * Din)     # A = -exp(A_log), packed

    return dict(
        d_state=N, R=R, NP=NP,
        norm_w=raw['norm_w'].reshape(1, -1),
        norm_b=raw['norm_b'].reshape(1, -1),
        in_proj_wT=raw['in_proj_w'].T.astype(jnp.bfloat16),   # (Dm, 2*Din)
        # TODO(synk): real checkpoints store depthwise conv weight as (Din, 1, Kc);
        # here it is created directly in (Kc, Din) layout.
        conv_w=raw['conv_w'],                                 # (Kc, Din), f32
        conv_b=raw['conv_b'].reshape(1, Din),
        w_big=w_big.astype(jnp.bfloat16),
        posA=posA,
        D=raw['D'].reshape(1, Din),
        dt_bias=raw['dt_proj_b'].reshape(1, Din),
        out_proj_wT=raw['out_proj_w'].T.astype(jnp.bfloat16),  # (Din, Dm)
    )


# --------------------------------- forward -----------------------------------

def mamba_lm_forward(params, input_ids):
    # TODO(synk): embedding gather kept in plain JAX (index glue, not the hot path).
    B, L = input_ids.shape
    h = jnp.take(params['embedding'], input_ids, axis=0)    # (B, L, d_model)
    Lp = -(-L // 8) * 8
    if Lp != L:                                              # causal ops: end padding inert
        h = jnp.pad(h, ((0, 0), (0, Lp - L), (0, 0)))
    residual = None                                          # first block: res = hidden
    for lp in params['layers']:
        h, residual = mamba_block(h, residual, lp)
    if residual is None:                                     # n_layer == 0 corner case
        residual = jnp.zeros_like(h)
    # TODO(synk): nn.Dropout(0.3) treated as eval-mode identity (no training RNG).
    logits = lm_head(h, residual, params['norm_f_w'], params['norm_f_b'],
                     params['lm_head_wT'])                   # (B, Lp, 128-padded V)
    return logits[:, :L, :params['vocab_size']]


def init_params(key, d_model=32, n_layer=2, vocab_size=96,
                d_state=16, d_conv=4, expand=2, pad_vocab_multiple=8):
    d_inner = expand * d_model
    dt_rank = -(-d_model // 16)                              # ceil(d_model / 16)
    if vocab_size % pad_vocab_multiple:
        vocab_size += pad_vocab_multiple - vocab_size % pad_vocab_multiple
    v_pad = -(-vocab_size // 128) * 128                      # lane-dense lm_head
    keys = iter(jax.random.split(key, 8 * n_layer + 4))

    def nrm(shape, scale=0.02):
        return (scale * jax.random.normal(next(keys), shape)).astype(jnp.float32)

    emb = nrm((vocab_size, d_model))
    layers = []
    for _ in range(n_layer):
        raw = dict(
            norm_w=jnp.ones((d_model,), jnp.float32),
            norm_b=jnp.zeros((d_model,), jnp.float32),
            in_proj_w=nrm((2 * d_inner, d_model)),
            conv_w=nrm((d_conv, d_inner), 0.1),
            conv_b=jnp.zeros((d_inner,), jnp.float32),
            x_proj_w_raw=nrm((dt_rank + 2 * d_state, d_inner)),
            dt_proj_w=nrm((d_inner, dt_rank), 0.1),
            dt_proj_b=nrm((d_inner,), 0.1),
            A_log=jnp.log(jnp.broadcast_to(
                jnp.arange(1, d_state + 1, dtype=jnp.float32), (d_inner, d_state))),
            D=jnp.ones((d_inner,), jnp.float32),
            out_proj_w=nrm((d_model, d_inner)),
        )
        layers.append(_prepare_layer(raw, dt_rank, d_state))

    emb_pad = jnp.zeros((v_pad, d_model), jnp.float32).at[:vocab_size].set(emb)
    return dict(
        embedding=emb,
        vocab_size=vocab_size,
        layers=layers,
        norm_f_w=jnp.ones((1, d_model), jnp.float32),
        norm_f_b=jnp.zeros((1, d_model), jnp.float32),
        lm_head_wT=emb_pad.T.astype(jnp.bfloat16),           # tie_weights(), 128-padded
        config=dict(d_state=d_state, dt_rank=dt_rank, d_conv=d_conv, d_inner=d_inner),
    )


if __name__ == "__main__":
    key = jax.random.PRNGKey(0)
    pkey, ikey = jax.random.split(key)
    VOCAB = 96
    params = init_params(pkey, d_model=32, n_layer=2, vocab_size=VOCAB)
    B, L = 2, 8
    input_ids = jax.random.randint(ikey, (B, L), 0, VOCAB)
    logits = mamba_lm_forward(params, input_ids)
    jax.block_until_ready(logits)
    assert logits.shape == (B, L, VOCAB)
    assert bool(jnp.all(jnp.isfinite(logits)))
    print("KERNEL_OK")
</pallas_src>

<mosaic_0001>
module attributes {stable_mosaic.version = 11 : i64} {
  func.func @_layer_kernel(%arg0: i32, %arg1: i32, %arg2: memref<1x8x32xf32, #tpu.memory_space<vmem>>, %arg3: memref<1x32xf32, #tpu.memory_space<vmem>>, %arg4: memref<1x32xf32, #tpu.memory_space<vmem>>, %arg5: memref<32x128xbf16, #tpu.memory_space<vmem>>, %arg6: memref<4x64xf32, #tpu.memory_space<vmem>>, %arg7: memref<1x64xf32, #tpu.memory_space<vmem>>, %arg8: memref<64x96xbf16, #tpu.memory_space<vmem>>, %arg9: memref<8x128xf32, #tpu.memory_space<vmem>>, %arg10: memref<1x64xf32, #tpu.memory_space<vmem>>, %arg11: memref<1x64xf32, #tpu.memory_space<vmem>>, %arg12: memref<64x32xbf16, #tpu.memory_space<vmem>>, %arg13: memref<1x8x32xf32, #tpu.memory_space<vmem>>, %arg14: memref<1x8x32xf32, #tpu.memory_space<vmem>>, %arg15: memref<8x128xf32, #tpu.memory_space<vmem>>, %arg16: memref<3x64xf32, #tpu.memory_space<vmem>>, %arg17: memref<8x8x128xf32, #tpu.memory_space<vmem>>, %arg18: memref<8x8x128xf32, #tpu.memory_space<vmem>>, %arg19: memref<8x8x128xf32, #tpu.memory_space<vmem>>) attributes {dimension_semantics = [#tpu.dimension_semantics<parallel>, #tpu.dimension_semantics<arbitrary>], iteration_bounds = array<i64: 2, 1>, scalar_prefetch = 0 : i64, scratch_operands = 5 : i64, tpu.core_type = #tpu.core_type<tc>, window_params = [{transform_indices = @transform_0, window_bounds = array<i64: 1, 8, 32>}, {pipeline_mode = #tpu.pipeline_mode<synchronous>, transform_indices = @transform_1, window_bounds = array<i64: 1, 32>}, {pipeline_mode = #tpu.pipeline_mode<synchronous>, transform_indices = @transform_2, window_bounds = array<i64: 1, 32>}, {pipeline_mode = #tpu.pipeline_mode<synchronous>, transform_indices = @transform_3, window_bounds = array<i64: 32, 128>}, {pipeline_mode = #tpu.pipeline_mode<synchronous>, transform_indices = @transform_4, window_bounds = array<i64: 4, 64>}, {pipeline_mode = #tpu.pipeline_mode<synchronous>, transform_indices = @transform_5, window_bounds = array<i64: 1, 64>}, {pipeline_mode = #tpu.pipeline_mode<synchronous>, transform_indices = @transform_6, window_bounds = array<i64: 64, 96>}, {pipeline_mode = #tpu.pipeline_mode<synchronous>, transform_indices = @transform_7, window_bounds = array<i64: 8, 128>}, {pipeline_mode = #tpu.pipeline_mode<synchronous>, transform_indices = @transform_8, window_bounds = array<i64: 1, 64>}, {pipeline_mode = #tpu.pipeline_mode<synchronous>, transform_indices = @transform_9, window_bounds = array<i64: 1, 64>}, {pipeline_mode = #tpu.pipeline_mode<synchronous>, transform_indices = @transform_10, window_bounds = array<i64: 64, 32>}, {transform_indices = @transform_11, window_bounds = array<i64: 1, 8, 32>}, {transform_indices = @transform_12, window_bounds = array<i64: 1, 8, 32>}]} {
    %c0_i32 = arith.constant 0 : i32
    %0 = arith.cmpi eq, %arg1, %c0_i32 : i32
    %1 = arith.extui %0 : i1 to i32
    %c0_i32_0 = arith.constant 0 : i32
    %2 = arith.cmpi ne, %1, %c0_i32_0 : i32
    scf.if %2 {
      %cst_111 = arith.constant 0.000000e+00 : f32
      %250 = vector.broadcast %cst_111 : f32 to vector<8x128xf32>
      %c0_112 = arith.constant 0 : index
      %c0_113 = arith.constant 0 : index
      %251 = vector.load %arg15[%c0_112, %c0_113] : memref<8x128xf32, #tpu.memory_space<vmem>>, vector<8x128xf32>
      tpu.vector_store %arg15[%c0_112, %c0_113], %250 {strides = array<i32>} : memref<8x128xf32, #tpu.memory_space<vmem>>, vector<8x128xf32>,
      %cst_114 = arith.constant 0.000000e+00 : f32
      %252 = vector.broadcast %cst_114 : f32 to vector<3x64xf32>
      %c0_115 = arith.constant 0 : index
      %c0_116 = arith.constant 0 : index
      %253 = vector.load %arg16[%c0_115, %c0_116] : memref<3x64xf32, #tpu.memory_space<vmem>>, vector<3x64xf32>
      tpu.vector_store %arg16[%c0_115, %c0_116], %252 {strides = array<i32>} : memref<3x64xf32, #tpu.memory_space<vmem>>, vector<3x64xf32>,
    } else {
    }
    %c0 = arith.constant 0 : index
    %c0_1 = arith.constant 0 : index
    %c0_2 = arith.constant 0 : index
    %3 = vector.load %arg2[%c0, %c0_1, %c0_2] : memref<1x8x32xf32, #tpu.memory_space<vmem>>, vector<1x8x32xf32>
    %4 = vector.shape_cast %3 : vector<1x8x32xf32> to vector<8x32xf32>
    %c0_3 = arith.constant 0 : index
    %c0_4 = arith.constant 0 : index
    %c0_5 = arith.constant 0 : index
    %5 = vector.load %arg14[%c0_3, %c0_4, %c0_5] : memref<1x8x32xf32, #tpu.memory_space<vmem>>, vector<1x8x32xf32>
    %6 = vector.shape_cast %5 : vector<1x8x32xf32> to vector<8x32xf32>
    %7 = vector.shape_cast %4 : vector<8x32xf32> to vector<1x8x32xf32>
    tpu.vector_store %arg14[%c0_3, %c0_4, %c0_5], %7 {strides = array<i32>} : memref<1x8x32xf32, #tpu.memory_space<vmem>>, vector<1x8x32xf32>,
    %cst = arith.constant dense<0.000000e+00> : vector<8xf32>
    %8 = vector.multi_reduction <add>, %4, %cst [1] : vector<8x32xf32> to vector<8xf32>
    %9 = vector.shape_cast %8 : vector<8xf32> to vector<8x1xf32>
    %cst_6 = arith.constant 3.200000e+01 : f32
    %10 = vector.broadcast %cst_6 : f32 to vector<8x1xf32>
    %11 = arith.divf %9, %10 : vector<8x1xf32>
    %12 = vector.broadcast %11 : vector<8x1xf32> to vector<8x32xf32>
    %13 = arith.subf %4, %12 : vector<8x32xf32>
    %14 = arith.mulf %13, %13 : vector<8x32xf32>
    %cst_7 = arith.constant dense<0.000000e+00> : vector<8xf32>
    %15 = vector.multi_reduction <add>, %14, %cst_7 [1] : vector<8x32xf32> to vector<8xf32>
    %16 = vector.shape_cast %15 : vector<8xf32> to vector<8x1xf32>
    %cst_8 = arith.constant 3.200000e+01 : f32
    %17 = vector.broadcast %cst_8 : f32 to vector<8x1xf32>
    %18 = arith.divf %16, %17 : vector<8x1xf32>
    %19 = vector.broadcast %11 : vector<8x1xf32> to vector<8x32xf32>
    %20 = arith.subf %4, %19 : vector<8x32xf32>
    %cst_9 = arith.constant 9.99999974E-6 : f32
    %21 = vector.broadcast %cst_9 : f32 to vector<8x1xf32>
    %22 = arith.addf %18, %21 : vector<8x1xf32>
    %23 = math.rsqrt %22 : vector<8x1xf32>
    %24 = vector.broadcast %23 : vector<8x1xf32> to vector<8x32xf32>
    %25 = arith.mulf %20, %24 : vector<8x32xf32>
    %c0_10 = arith.constant 0 : index
    %c0_11 = arith.constant 0 : index
    %26 = vector.load %arg3[%c0_10, %c0_11] : memref<1x32xf32, #tpu.memory_space<vmem>>, vector<1x32xf32>
    %27 = vector.broadcast %26 : vector<1x32xf32> to vector<8x32xf32>
    %28 = arith.mulf %25, %27 : vector<8x32xf32>
    %c0_12 = arith.constant 0 : index
    %c0_13 = arith.constant 0 : index
    %29 = vector.load %arg4[%c0_12, %c0_13] : memref<1x32xf32, #tpu.memory_space<vmem>>, vector<1x32xf32>
    %30 = vector.broadcast %29 : vector<1x32xf32> to vector<8x32xf32>
    %31 = arith.addf %28, %30 : vector<8x32xf32>
    %32 = arith.truncf %31 : vector<8x32xf32> to vector<8x32xbf16>
    %c0_14 = arith.constant 0 : index
    %c0_15 = arith.constant 0 : index
    %33 = vector.load %arg5[%c0_14, %c0_15] : memref<32x128xbf16, #tpu.memory_space<vmem>>, vector<32x128xbf16>
    %cst_16 = arith.constant dense<0.000000e+00> : vector<8x128xf32>
    %34 = tpu.matmul %32, %33, %cst_16 {dimension_numbers = #tpu.dot_dimension_numbers<[1], [0], [0], [1], [0, 0, 1, 1], [], []>} : vector<8x32xbf16>, vector<32x128xbf16>, vector<8x128xf32> -> vector<8x128xf32>
    %35 = vector.extract_strided_slice %34 {offsets = [0, 0], sizes = [8, 64], strides = [1, 1]} : vector<8x128xf32> to vector<8x64xf32>
    %36 = vector.extract_strided_slice %34 {offsets = [0, 64], sizes = [8, 64], strides = [1, 1]} : vector<8x128xf32> to vector<8x64xf32>
    %c0_17 = arith.constant 0 : index
    %c0_18 = arith.constant 0 : index
    %37 = vector.load %arg16[%c0_17, %c0_18] : memref<3x64xf32, #tpu.memory_space<vmem>>, vector<3x64xf32>
    %38 = tpu.concatenate %37, %35 in 0 : vector<3x64xf32>, vector<8x64xf32> -> vector<11x64xf32>
    %39 = vector.extract_strided_slice %35 {offsets = [5, 0], sizes = [3, 64], strides = [1, 1]} : vector<8x64xf32> to vector<3x64xf32>
    %c0_19 = arith.constant 0 : index
    %c0_20 = arith.constant 0 : index
    %40 = vector.load %arg16[%c0_19, %c0_20] : memref<3x64xf32, #tpu.memory_space<vmem>>, vector<3x64xf32>
    tpu.vector_store %arg16[%c0_19, %c0_20], %39 {strides = array<i32>} : memref<3x64xf32, #tpu.memory_space<vmem>>, vector<3x64xf32>,
    %cst_21 = arith.constant 0.000000e+00 : f32
    %41 = vector.broadcast %cst_21 : f32 to vector<8x64xf32>
    %c0_22 = arith.constant 0 : index
    %c0_23 = arith.constant 0 : index
    %42 = vector.load %arg7[%c0_22, %c0_23] : memref<1x64xf32, #tpu.memory_space<vmem>>, vector<1x64xf32>
    %43 = vector.broadcast %42 : vector<1x64xf32> to vector<8x64xf32>
    %44 = arith.addf %41, %43 : vector<8x64xf32>
    %c0_24 = arith.constant 0 : index
    %c0_25 = arith.constant 0 : index
    %45 = vector.load %arg6[%c0_24, %c0_25] : memref<4x64xf32, #tpu.memory_space<vmem>>, vector<4x64xf32>
    %46 = vector.extract_strided_slice %38 {offsets = [0, 0], sizes = [8, 64], strides = [1, 1]} : vector<11x64xf32> to vector<8x64xf32>
    %47 = vector.extract_strided_slice %45 {offsets = [0, 0], sizes = [1, 64], strides = [1, 1]} : vector<4x64xf32> to vector<1x64xf32>
    %48 = vector.broadcast %47 : vector<1x64xf32> to vector<8x64xf32>
    %49 = arith.mulf %46, %48 : vector<8x64xf32>
    %50 = arith.addf %44, %49 : vector<8x64xf32>
    %51 = vector.extract_strided_slice %38 {offsets = [1, 0], sizes = [8, 64], strides = [1, 1]} : vector<11x64xf32> to vector<8x64xf32>
    %52 = vector.extract_strided_slice %45 {offsets = [1, 0], sizes = [1, 64], strides = [1, 1]} : vector<4x64xf32> to vector<1x64xf32>
    %53 = vector.broadcast %52 : vector<1x64xf32> to vector<8x64xf32>
    %54 = arith.mulf %51, %53 : vector<8x64xf32>
    %55 = arith.addf %50, %54 : vector<8x64xf32>
    %56 = vector.extract_strided_slice %38 {offsets = [2, 0], sizes = [8, 64], strides = [1, 1]} : vector<11x64xf32> to vector<8x64xf32>
    %57 = vector.extract_strided_slice %45 {offsets = [2, 0], sizes = [1, 64], strides = [1, 1]} : vector<4x64xf32> to vector<1x64xf32>
    %58 = vector.broadcast %57 : vector<1x64xf32> to vector<8x64xf32>
    %59 = arith.mulf %56, %58 : vector<8x64xf32>
    %60 = arith.addf %55, %59 : vector<8x64xf32>
    %61 = vector.extract_strided_slice %38 {offsets = [3, 0], sizes = [8, 64], strides = [1, 1]} : vector<11x64xf32> to vector<8x64xf32>
    %62 = vector.extract_strided_slice %45 {offsets = [3, 0], sizes = [1, 64], strides = [1, 1]} : vector<4x64xf32> to vector<1x64xf32>
    %63 = vector.broadcast %62 : vector<1x64xf32> to vector<8x64xf32>
    %64 = arith.mulf %61, %63 : vector<8x64xf32>
    %65 = arith.addf %60, %64 : vector<8x64xf32>
    %66 = arith.negf %65 : vector<8x64xf32>
    %67 = math.exp %66 : vector<8x64xf32>
    %cst_26 = arith.constant 1.000000e+00 : f32
    %68 = vector.broadcast %cst_26 : f32 to vector<8x64xf32>
    %69 = arith.addf %68, %67 : vector<8x64xf32>
    %70 = arith.divf %68, %69 : vector<8x64xf32>
    %71 = arith.mulf %65, %70 : vector<8x64xf32>
    %72 = arith.truncf %71 : vector<8x64xf32> to vector<8x64xbf16>
    %c0_27 = arith.constant 0 : index
    %c0_28 = arith.constant 0 : index
    %73 = vector.load %arg8[%c0_27, %c0_28] : memref<64x96xbf16, #tpu.memory_space<vmem>>, vector<64x96xbf16>
    %cst_29 = arith.constant dense<0.000000e+00> : vector<8x96xf32>
    %74 = tpu.matmul %72, %73, %cst_29 {dimension_numbers = #tpu.dot_dimension_numbers<[1], [0], [0], [1], [0, 0, 1, 1], [], []>} : vector<8x64xbf16>, vector<64x96xbf16>, vector<8x96xf32> -> vector<8x96xf32>
    %75 = vector.extract_strided_slice %74 {offsets = [0, 0], sizes = [8, 64], strides = [1, 1]} : vector<8x96xf32> to vector<8x64xf32>
    %c0_30 = arith.constant 0 : index
    %c0_31 = arith.constant 0 : index
    %76 = vector.load %arg11[%c0_30, %c0_31] : memref<1x64xf32, #tpu.memory_space<vmem>>, vector<1x64xf32>
    %77 = vector.broadcast %76 : vector<1x64xf32> to vector<8x64xf32>
    %78 = arith.addf %75, %77 : vector<8x64xf32>
    %cst_32 = arith.constant 0.000000e+00 : f32
    %79 = vector.broadcast %cst_32 : f32 to vector<8x64xf32>
    %80 = arith.maximumf %78, %79 : vector<8x64xf32>
    %81 = vector.broadcast %cst_32 : f32 to vector<8x64xf32>
    %82 = arith.subf %78, %81 : vector<8x64xf32>
    %83 = arith.cmpf one, %82, %82 : vector<8x64xf32>
    %84 = vector.broadcast %cst_32 : f32 to vector<8x64xf32>
    %85 = arith.addf %78, %84 : vector<8x64xf32>
    %86 = math.absf %82 : vector<8x64xf32>
    %cst_33 = arith.constant 0.000000e+00 : f32
    %87 = vector.broadcast %cst_33 : f32 to vector<8x64xf32>
    %88 = arith.subf %87, %86 : vector<8x64xf32>
    %89 = math.exp %88 : vector<8x64xf32>
    %90 = math.log1p %89 : vector<8x64xf32>
    %91 = arith.addf %80, %90 : vector<8x64xf32>
    %92 = arith.select %83, %85, %91 : vector<8x64xi1>, vector<8x64xf32>
    %93 = arith.mulf %92, %71 : vector<8x64xf32>
    %94 = tpu.concatenate %92, %92 in 1 : vector<8x64xf32>, vector<8x64xf32> -> vector<8x128xf32>
    %95 = vector.shape_cast %94 : vector<8x128xf32> to vector<8x1x128xf32>
    %c0_34 = arith.constant 0 : index
    %c0_35 = arith.constant 0 : index
    %96 = vector.load %arg9[%c0_34, %c0_35] : memref<8x128xf32, #tpu.memory_space<vmem>>, vector<8x128xf32>
    %97 = vector.shape_cast %96 : vector<8x128xf32> to vector<1x8x128xf32>
    %98 = vector.broadcast %95 : vector<8x1x128xf32> to vector<8x8x128xf32>
    %99 = vector.broadcast %97 : vector<1x8x128xf32> to vector<8x8x128xf32>
    %100 = arith.mulf %98, %99 : vector<8x8x128xf32>
    %cst_36 = arith.constant 0.000000e+00 : f32
    %101 = vector.broadcast %cst_36 : f32 to vector<8x8x128xf32>
    %102 = arith.subf %101, %100 : vector<8x8x128xf32>
    %103 = math.exp %102 : vector<8x8x128xf32>
    %c0_37 = arith.constant 0 : index
    %c0_38 = arith.constant 0 : index
    %c0_39 = arith.constant 0 : index
    %104 = vector.load %arg17[%c0_37, %c0_38, %c0_39] : memref<8x8x128xf32, #tpu.memory_space<vmem>>, vector<8x8x128xf32>
    tpu.vector_store %arg17[%c0_37, %c0_38, %c0_39], %103 {strides = array<i32>} : memref<8x8x128xf32, #tpu.memory_space<vmem>>, vector<8x8x128xf32>,
    %105 = vector.extract_strided_slice %74 {offsets = [0, 64], sizes = [8, 8], strides = [1, 1]} : vector<8x96xf32> to vector<8x8xf32>
    %106 = vector.shape_cast %105 : vector<8x8xf32> to vector<8x8x1xf32>
    %107 = vector.shape_cast %93 : vector<8x64xf32> to vector<8x1x64xf32>
    %108 = vector.broadcast %106 : vector<8x8x1xf32> to vector<8x8x64xf32>
    %109 = vector.broadcast %107 : vector<8x1x64xf32> to vector<8x8x64xf32>
    %110 = arith.mulf %108, %109 : vector<8x8x64xf32>
    %111 = vector.extract_strided_slice %74 {offsets = [0, 72], sizes = [8, 8], strides = [1, 1]} : vector<8x96xf32> to vector<8x8xf32>
    %112 = vector.shape_cast %111 : vector<8x8xf32> to vector<8x8x1xf32>
    %113 = vector.shape_cast %93 : vector<8x64xf32> to vector<8x1x64xf32>
    %114 = vector.broadcast %112 : vector<8x8x1xf32> to vector<8x8x64xf32>
    %115 = vector.broadcast %113 : vector<8x1x64xf32> to vector<8x8x64xf32>
    %116 = arith.mulf %114, %115 : vector<8x8x64xf32>
    %117 = tpu.concatenate %110, %116 in 2 : vector<8x8x64xf32>, vector<8x8x64xf32> -> vector<8x8x128xf32>
    %c0_40 = arith.constant 0 : index
    %c0_41 = arith.constant 0 : index
    %c0_42 = arith.constant 0 : index
    %118 = vector.load %arg18[%c0_40, %c0_41, %c0_42] : memref<8x8x128xf32, #tpu.memory_space<vmem>>, vector<8x8x128xf32>
    tpu.vector_store %arg18[%c0_40, %c0_41, %c0_42], %117 {strides = array<i32>} : memref<8x8x128xf32, #tpu.memory_space<vmem>>, vector<8x8x128xf32>,
    %c0_43 = arith.constant 0 : index
    %c0_44 = arith.constant 0 : index
    %119 = vector.load %arg15[%c0_43, %c0_44] : memref<8x128xf32, #tpu.memory_space<vmem>>, vector<8x128xf32>
    %c0_i32_45 = arith.constant 0 : i32
    %120 = arith.index_cast %c0_i32_45 : i32 to index
    %c0_46 = arith.constant 0 : index
    %c0_47 = arith.constant 0 : index
    %121 = vector.load %arg17[%120, %c0_46, %c0_47] : memref<8x8x128xf32, #tpu.memory_space<vmem>>, vector<1x8x128xf32>
    %122 = vector.shape_cast %121 : vector<1x8x128xf32> to vector<8x128xf32>
    %123 = arith.mulf %122, %119 : vector<8x128xf32>
    %124 = arith.index_cast %c0_i32_45 : i32 to index
    %c0_48 = arith.constant 0 : index
    %c0_49 = arith.constant 0 : index
    %125 = vector.load %arg18[%124, %c0_48, %c0_49] : memref<8x8x128xf32, #tpu.memory_space<vmem>>, vector<1x8x128xf32>
    %126 = vector.shape_cast %125 : vector<1x8x128xf32> to vector<8x128xf32>
    %127 = arith.addf %123, %126 : vector<8x128xf32>
    %128 = arith.index_cast %c0_i32_45 : i32 to index
    %c0_50 = arith.constant 0 : index
    %c0_51 = arith.constant 0 : index
    %129 = vector.load %arg19[%128, %c0_50, %c0_51] : memref<8x8x128xf32, #tpu.memory_space<vmem>>, vector<1x8x128xf32>
    %130 = vector.shape_cast %129 : vector<1x8x128xf32> to vector<8x128xf32>
    %131 = vector.shape_cast %127 : vector<8x128xf32> to vector<1x8x128xf32>
    tpu.vector_store %arg19[%128, %c0_50, %c0_51], %131 {strides = array<i32>} : memref<8x8x128xf32, #tpu.memory_space<vmem>>, vector<1x8x128xf32>,
    %c1_i32 = arith.constant 1 : i32
    %132 = arith.index_cast %c1_i32 : i32 to index
    %c0_52 = arith.constant 0 : index
    %c0_53 = arith.constant 0 : index
    %133 = vector.load %arg17[%132, %c0_52, %c0_53] : memref<8x8x128xf32, #tpu.memory_space<vmem>>, vector<1x8x128xf32>
    %134 = vector.shape_cast %133 : vector<1x8x128xf32> to vector<8x128xf32>
    %135 = arith.mulf %134, %127 : vector<8x128xf32>
    %136 = arith.index_cast %c1_i32 : i32 to index
    %c0_54 = arith.constant 0 : index
    %c0_55 = arith.constant 0 : index
    %137 = vector.load %arg18[%136, %c0_54, %c0_55] : memref<8x8x128xf32, #tpu.memory_space<vmem>>, vector<1x8x128xf32>
    %138 = vector.shape_cast %137 : vector<1x8x128xf32> to vector<8x128xf32>
    %139 = arith.addf %135, %138 : vector<8x128xf32>
    %140 = arith.index_cast %c1_i32 : i32 to index
    %c0_56 = arith.constant 0 : index
    %c0_57 = arith.constant 0 : index
    %141 = vector.load %arg19[%140, %c0_56, %c0_57] : memref<8x8x128xf32, #tpu.memory_space<vmem>>, vector<1x8x128xf32>
    %142 = vector.shape_cast %141 : vector<1x8x128xf32> to vector<8x128xf32>
    %143 = vector.shape_cast %139 : vector<8x128xf32> to vector<1x8x128xf32>
    tpu.vector_store %arg19[%140, %c0_56, %c0_57], %143 {strides = array<i32>} : memref<8x8x128xf32, #tpu.memory_space<vmem>>, vector<1x8x128xf32>,
    %c2_i32 = arith.constant 2 : i32
    %144 = arith.index_cast %c2_i32 : i32 to index
    %c0_58 = arith.constant 0 : index
    %c0_59 = arith.constant 0 : index
    %145 = vector.load %arg17[%144, %c0_58, %c0_59] : memref<8x8x128xf32, #tpu.memory_space<vmem>>, vector<1x8x128xf32>
    %146 = vector.shape_cast %145 : vector<1x8x128xf32> to vector<8x128xf32>
    %147 = arith.mulf %146, %139 : vector<8x128xf32>
    %148 = arith.index_cast %c2_i32 : i32 to index
    %c0_60 = arith.constant 0 : index
    %c0_61 = arith.constant 0 : index
    %149 = vector.load %arg18[%148, %c0_60, %c0_61] : memref<8x8x128xf32, #tpu.memory_space<vmem>>, vector<1x8x128xf32>
    %150 = vector.shape_cast %149 : vector<1x8x128xf32> to vector<8x128xf32>
    %151 = arith.addf %147, %150 : vector<8x128xf32>
    %152 = arith.index_cast %c2_i32 : i32 to index
    %c0_62 = arith.constant 0 : index
    %c0_63 = arith.constant 0 : index
    %153 = vector.load %arg19[%152, %c0_62, %c0_63] : memref<8x8x128xf32, #tpu.memory_space<vmem>>, vector<1x8x128xf32>
    %154 = vector.shape_cast %153 : vector<1x8x128xf32> to vector<8x128xf32>
    %155 = vector.shape_cast %151 : vector<8x128xf32> to vector<1x8x128xf32>
    tpu.vector_store %arg19[%152, %c0_62, %c0_63], %155 {strides = array<i32>} : memref<8x8x128xf32, #tpu.memory_space<vmem>>, vector<1x8x128xf32>,
    %c3_i32 = arith.constant 3 : i32
    %156 = arith.index_cast %c3_i32 : i32 to index
    %c0_64 = arith.constant 0 : index
    %c0_65 = arith.constant 0 : index
    %157 = vector.load %arg17[%156, %c0_64, %c0_65] : memref<8x8x128xf32, #tpu.memory_space<vmem>>, vector<1x8x128xf32>
    %158 = vector.shape_cast %157 : vector<1x8x128xf32> to vector<8x128xf32>
    %159 = arith.mulf %158, %151 : vector<8x128xf32>
    %160 = arith.index_cast %c3_i32 : i32 to index
    %c0_66 = arith.constant 0 : index
    %c0_67 = arith.constant 0 : index
    %161 = vector.load %arg18[%160, %c0_66, %c0_67] : memref<8x8x128xf32, #tpu.memory_space<vmem>>, vector<1x8x128xf32>
    %162 = vector.shape_cast %161 : vector<1x8x128xf32> to vector<8x128xf32>
    %163 = arith.addf %159, %162 : vector<8x128xf32>
    %164 = arith.index_cast %c3_i32 : i32 to index
    %c0_68 = arith.constant 0 : index
    %c0_69 = arith.constant 0 : index
    %165 = vector.load %arg19[%164, %c0_68, %c0_69] : memref<8x8x128xf32, #tpu.memory_space<vmem>>, vector<1x8x128xf32>
    %166 = vector.shape_cast %165 : vector<1x8x128xf32> to vector<8x128xf32>
    %167 = vector.shape_cast %163 : vector<8x128xf32> to vector<1x8x128xf32>
    tpu.vector_store %arg19[%164, %c0_68, %c0_69], %167 {strides = array<i32>} : memref<8x8x128xf32, #tpu.memory_space<vmem>>, vector<1x8x128xf32>,
    %c4_i32 = arith.constant 4 : i32
    %168 = arith.index_cast %c4_i32 : i32 to index
    %c0_70 = arith.constant 0 : index
    %c0_71 = arith.constant 0 : index
    %169 = vector.load %arg17[%168, %c0_70, %c0_71] : memref<8x8x128xf32, #tpu.memory_space<vmem>>, vector<1x8x128xf32>
    %170 = vector.shape_cast %169 : vector<1x8x128xf32> to vector<8x128xf32>
    %171 = arith.mulf %170, %163 : vector<8x128xf32>
    %172 = arith.index_cast %c4_i32 : i32 to index
    %c0_72 = arith.constant 0 : index
    %c0_73 = arith.constant 0 : index
    %173 = vector.load %arg18[%172, %c0_72, %c0_73] : memref<8x8x128xf32, #tpu.memory_space<vmem>>, vector<1x8x128xf32>
    %174 = vector.shape_cast %173 : vector<1x8x128xf32> to vector<8x128xf32>
    %175 = arith.addf %171, %174 : vector<8x128xf32>
    %176 = arith.index_cast %c4_i32 : i32 to index
    %c0_74 = arith.constant 0 : index
    %c0_75 = arith.constant 0 : index
    %177 = vector.load %arg19[%176, %c0_74, %c0_75] : memref<8x8x128xf32, #tpu.memory_space<vmem>>, vector<1x8x128xf32>
    %178 = vector.shape_cast %177 : vector<1x8x128xf32> to vector<8x128xf32>
    %179 = vector.shape_cast %175 : vector<8x128xf32> to vector<1x8x128xf32>
    tpu.vector_store %arg19[%176, %c0_74, %c0_75], %179 {strides = array<i32>} : memref<8x8x128xf32, #tpu.memory_space<vmem>>, vector<1x8x128xf32>,
    %c5_i32 = arith.constant 5 : i32
    %180 = arith.index_cast %c5_i32 : i32 to index
    %c0_76 = arith.constant 0 : index
    %c0_77 = arith.constant 0 : index
    %181 = vector.load %arg17[%180, %c0_76, %c0_77] : memref<8x8x128xf32, #tpu.memory_space<vmem>>, vector<1x8x128xf32>
    %182 = vector.shape_cast %181 : vector<1x8x128xf32> to vector<8x128xf32>
    %183 = arith.mulf %182, %175 : vector<8x128xf32>
    %184 = arith.index_cast %c5_i32 : i32 to index
    %c0_78 = arith.constant 0 : index
    %c0_79 = arith.constant 0 : index
    %185 = vector.load %arg18[%184, %c0_78, %c0_79] : memref<8x8x128xf32, #tpu.memory_space<vmem>>, vector<1x8x128xf32>
    %186 = vector.shape_cast %185 : vector<1x8x128xf32> to vector<8x128xf32>
    %187 = arith.addf %183, %186 : vector<8x128xf32>
    %188 = arith.index_cast %c5_i32 : i32 to index
    %c0_80 = arith.constant 0 : index
    %c0_81 = arith.constant 0 : index
    %189 = vector.load %arg19[%188, %c0_80, %c0_81] : memref<8x8x128xf32, #tpu.memory_space<vmem>>, vector<1x8x128xf32>
    %190 = vector.shape_cast %189 : vector<1x8x128xf32> to vector<8x128xf32>
    %191 = vector.shape_cast %187 : vector<8x128xf32> to vector<1x8x128xf32>
    tpu.vector_store %arg19[%188, %c0_80, %c0_81], %191 {strides = array<i32>} : memref<8x8x128xf32, #tpu.memory_space<vmem>>, vector<1x8x128xf32>,
    %c6_i32 = arith.constant 6 : i32
    %192 = arith.index_cast %c6_i32 : i32 to index
    %c0_82 = arith.constant 0 : index
    %c0_83 = arith.constant 0 : index
    %193 = vector.load %arg17[%192, %c0_82, %c0_83] : memref<8x8x128xf32, #tpu.memory_space<vmem>>, vector<1x8x128xf32>
    %194 = vector.shape_cast %193 : vector<1x8x128xf32> to vector<8x128xf32>
    %195 = arith.mulf %194, %187 : vector<8x128xf32>
    %196 = arith.index_cast %c6_i32 : i32 to index
    %c0_84 = arith.constant 0 : index
    %c0_85 = arith.constant 0 : index
    %197 = vector.load %arg18[%196, %c0_84, %c0_85] : memref<8x8x128xf32, #tpu.memory_space<vmem>>, vector<1x8x128xf32>
    %198 = vector.shape_cast %197 : vector<1x8x128xf32> to vector<8x128xf32>
    %199 = arith.addf %195, %198 : vector<8x128xf32>
    %200 = arith.index_cast %c6_i32 : i32 to index
    %c0_86 = arith.constant 0 : index
    %c0_87 = arith.constant 0 : index
    %201 = vector.load %arg19[%200, %c0_86, %c0_87] : memref<8x8x128xf32, #tpu.memory_space<vmem>>, vector<1x8x128xf32>
    %202 = vector.shape_cast %201 : vector<1x8x128xf32> to vector<8x128xf32>
    %203 = vector.shape_cast %199 : vector<8x128xf32> to vector<1x8x128xf32>
    tpu.vector_store %arg19[%200, %c0_86, %c0_87], %203 {strides = array<i32>} : memref<8x8x128xf32, #tpu.memory_space<vmem>>, vector<1x8x128xf32>,
    %c7_i32 = arith.constant 7 : i32
    %204 = arith.index_cast %c7_i32 : i32 to index
    %c0_88 = arith.constant 0 : index
    %c0_89 = arith.constant 0 : index
    %205 = vector.load %arg17[%204, %c0_88, %c0_89] : memref<8x8x128xf32, #tpu.memory_space<vmem>>, vector<1x8x128xf32>
    %206 = vector.shape_cast %205 : vector<1x8x128xf32> to vector<8x128xf32>
    %207 = arith.mulf %206, %199 : vector<8x128xf32>
    %208 = arith.index_cast %c7_i32 : i32 to index
    %c0_90 = arith.constant 0 : index
    %c0_91 = arith.constant 0 : index
    %209 = vector.load %arg18[%208, %c0_90, %c0_91] : memref<8x8x128xf32, #tpu.memory_space<vmem>>, vector<1x8x128xf32>
    %210 = vector.shape_cast %209 : vector<1x8x128xf32> to vector<8x128xf32>
    %211 = arith.addf %207, %210 : vector<8x128xf32>
    %212 = arith.index_cast %c7_i32 : i32 to index
    %c0_92 = arith.constant 0 : index
    %c0_93 = arith.constant 0 : index
    %213 = vector.load %arg19[%212, %c0_92, %c0_93] : memref<8x8x128xf32, #tpu.memory_space<vmem>>, vector<1x8x128xf32>
    %214 = vector.shape_cast %213 : vector<1x8x128xf32> to vector<8x128xf32>
    %215 = vector.shape_cast %211 : vector<8x128xf32> to vector<1x8x128xf32>
    tpu.vector_store %arg19[%212, %c0_92, %c0_93], %215 {strides = array<i32>} : memref<8x8x128xf32, #tpu.memory_space<vmem>>, vector<1x8x128xf32>,
    %c8_i32 = arith.constant 8 : i32
    %c0_94 = arith.constant 0 : index
    %c0_95 = arith.constant 0 : index
    %216 = vector.load %arg15[%c0_94, %c0_95] : memref<8x128xf32, #tpu.memory_space<vmem>>, vector<8x128xf32>
    tpu.vector_store %arg15[%c0_94, %c0_95], %211 {strides = array<i32>} : memref<8x128xf32, #tpu.memory_space<vmem>>, vector<8x128xf32>,
    %c0_96 = arith.constant 0 : index
    %c0_97 = arith.constant 0 : index
    %c0_98 = arith.constant 0 : index
    %217 = vector.load %arg19[%c0_96, %c0_97, %c0_98] : memref<8x8x128xf32, #tpu.memory_space<vmem>>, vector<8x8x128xf32>
    %cst_99 = arith.constant 0.000000e+00 : f32
    %218 = vector.broadcast %cst_99 : f32 to vector<8x64xf32>
    %219 = vector.extract_strided_slice %74 {offsets = [0, 80], sizes = [8, 8], strides = [1, 1]} : vector<8x96xf32> to vector<8x8xf32>
    %220 = vector.extract_strided_slice %217 {offsets = [0, 0, 0], sizes = [8, 8, 64], strides = [1, 1, 1]} : vector<8x8x128xf32> to vector<8x8x64xf32>
    %221 = vector.shape_cast %219 : vector<8x8xf32> to vector<8x8x1xf32>
    %222 = vector.broadcast %221 : vector<8x8x1xf32> to vector<8x8x64xf32>
    %223 = arith.mulf %220, %222 : vector<8x8x64xf32>
    %cst_100 = arith.constant dense<0.000000e+00> : vector<8x64xf32>
    %224 = vector.multi_reduction <add>, %223, %cst_100 [1] : vector<8x8x64xf32> to vector<8x64xf32>
    %225 = arith.addf %218, %224 : vector<8x64xf32>
    %226 = vector.extract_strided_slice %74 {offsets = [0, 88], sizes = [8, 8], strides = [1, 1]} : vector<8x96xf32> to vector<8x8xf32>
    %227 = vector.extract_strided_slice %217 {offsets = [0, 0, 64], sizes = [8, 8, 64], strides = [1, 1, 1]} : vector<8x8x128xf32> to vector<8x8x64xf32>
    %228 = vector.shape_cast %226 : vector<8x8xf32> to vector<8x8x1xf32>
    %229 = vector.broadcast %228 : vector<8x8x1xf32> to vector<8x8x64xf32>
    %230 = arith.mulf %227, %229 : vector<8x8x64xf32>
    %cst_101 = arith.constant dense<0.000000e+00> : vector<8x64xf32>
    %231 = vector.multi_reduction <add>, %230, %cst_101 [1] : vector<8x8x64xf32> to vector<8x64xf32>
    %232 = arith.addf %225, %231 : vector<8x64xf32>
    %c0_102 = arith.constant 0 : index
    %c0_103 = arith.constant 0 : index
    %233 = vector.load %arg10[%c0_102, %c0_103] : memref<1x64xf32, #tpu.memory_space<vmem>>, vector<1x64xf32>
    %234 = vector.broadcast %233 : vector<1x64xf32> to vector<8x64xf32>
    %235 = arith.mulf %71, %234 : vector<8x64xf32>
    %236 = arith.addf %232, %235 : vector<8x64xf32>
    %237 = arith.negf %36 : vector<8x64xf32>
    %238 = math.exp %237 : vector<8x64xf32>
    %cst_104 = arith.constant 1.000000e+00 : f32
    %239 = vector.broadcast %cst_104 : f32 to vector<8x64xf32>
    %240 = arith.addf %239, %238 : vector<8x64xf32>
    %241 = arith.divf %239, %240 : vector<8x64xf32>
    %242 = arith.mulf %36, %241 : vector<8x64xf32>
    %243 = arith.mulf %236, %242 : vector<8x64xf32>
    %244 = arith.truncf %243 : vector<8x64xf32> to vector<8x64xbf16>
    %c0_105 = arith.constant 0 : index
    %c0_106 = arith.constant 0 : index
    %245 = vector.load %arg12[%c0_105, %c0_106] : memref<64x32xbf16, #tpu.memory_space<vmem>>, vector<64x32xbf16>
    %cst_107 = arith.constant dense<0.000000e+00> : vector<8x32xf32>
    %246 = tpu.matmul %244, %245, %cst_107 {dimension_numbers = #tpu.dot_dimension_numbers<[1], [0], [0], [1], [0, 0, 1, 1], [], []>} : vector<8x64xbf16>, vector<64x32xbf16>, vector<8x32xf32> -> vector<8x32xf32>
    %c0_108 = arith.constant 0 : index
    %c0_109 = arith.constant 0 : index
    %c0_110 = arith.constant 0 : index
    %247 = vector.load %arg13[%c0_108, %c0_109, %c0_110] : memref<1x8x32xf32, #tpu.memory_space<vmem>>, vector<1x8x32xf32>
    %248 = vector.shape_cast %247 : vector<1x8x32xf32> to vector<8x32xf32>
    %249 = vector.shape_cast %246 : vector<8x32xf32> to vector<1x8x32xf32>
    tpu.vector_store %arg13[%c0_108, %c0_109, %c0_110], %249 {strides = array<i32>} : memref<1x8x32xf32, #tpu.memory_space<vmem>>, vector<1x8x32xf32>,
    return
  }
  func.func @transform_0(%arg0: i32, %arg1: i32) -> (i32, i32, i32) {
    %c0_i32 = arith.constant 0 : i32
    %c0_i32_0 = arith.constant 0 : i32
    return %arg0, %arg1, %c0_i32 : i32, i32, i32
  }
  func.func @transform_1(%arg0: i32, %arg1: i32) -> (i32, i32) {
    %c0_i32 = arith.constant 0 : i32
    %c0_i32_0 = arith.constant 0 : i32
    %c0_i32_1 = arith.constant 0 : i32
    return %c0_i32, %c0_i32_0 : i32, i32
  }
  func.func @transform_2(%arg0: i32, %arg1: i32) -> (i32, i32) {
    %c0_i32 = arith.constant 0 : i32
    %c0_i32_0 = arith.constant 0 : i32
    %c0_i32_1 = arith.constant 0 : i32
    return %c0_i32, %c0_i32_0 : i32, i32
  }
  func.func @transform_3(%arg0: i32, %arg1: i32) -> (i32, i32) {
    %c0_i32 = arith.constant 0 : i32
    %c0_i32_0 = arith.constant 0 : i32
    %c0_i32_1 = arith.constant 0 : i32
    return %c0_i32, %c0_i32_0 : i32, i32
  }
  func.func @transform_4(%arg0: i32, %arg1: i32) -> (i32, i32) {
    %c0_i32 = arith.constant 0 : i32
    %c0_i32_0 = arith.constant 0 : i32
    %c0_i32_1 = arith.constant 0 : i32
    return %c0_i32, %c0_i32_0 : i32, i32
  }
  func.func @transform_5(%arg0: i32, %arg1: i32) -> (i32, i32) {
    %c0_i32 = arith.constant 0 : i32
    %c0_i32_0 = arith.constant 0 : i32
    %c0_i32_1 = arith.constant 0 : i32
    return %c0_i32, %c0_i32_0 : i32, i32
  }
  func.func @transform_6(%arg0: i32, %arg1: i32) -> (i32, i32) {
    %c0_i32 = arith.constant 0 : i32
    %c0_i32_0 = arith.constant 0 : i32
    %c0_i32_1 = arith.constant 0 : i32
    return %c0_i32, %c0_i32_0 : i32, i32
  }
  func.func @transform_7(%arg0: i32, %arg1: i32) -> (i32, i32) {
    %c0_i32 = arith.constant 0 : i32
    %c0_i32_0 = arith.constant 0 : i32
    %c0_i32_1 = arith.constant 0 : i32
    return %c0_i32, %c0_i32_0 : i32, i32
  }
  func.func @transform_8(%arg0: i32, %arg1: i32) -> (i32, i32) {
    %c0_i32 = arith.constant 0 : i32
    %c0_i32_0 = arith.constant 0 : i32
    %c0_i32_1 = arith.constant 0 : i32
    return %c0_i32, %c0_i32_0 : i32, i32
  }
  func.func @transform_9(%arg0: i32, %arg1: i32) -> (i32, i32) {
    %c0_i32 = arith.constant 0 : i32
    %c0_i32_0 = arith.constant 0 : i32
    %c0_i32_1 = arith.constant 0 : i32
    return %c0_i32, %c0_i32_0 : i32, i32
  }
  func.func @transform_10(%arg0: i32, %arg1: i32) -> (i32, i32) {
    %c0_i32 = arith.constant 0 : i32
    %c0_i32_0 = arith.constant 0 : i32
    %c0_i32_1 = arith.constant 0 : i32
    return %c0_i32, %c0_i32_0 : i32, i32
  }
  func.func @transform_11(%arg0: i32, %arg1: i32) -> (i32, i32, i32) {
    %c0_i32 = arith.constant 0 : i32
    %c0_i32_0 = arith.constant 0 : i32
    return %arg0, %arg1, %c0_i32 : i32, i32, i32
  }
  func.func @transform_12(%arg0: i32, %arg1: i32) -> (i32, i32, i32) {
    %c0_i32 = arith.constant 0 : i32
    %c0_i32_0 = arith.constant 0 : i32
    return %arg0, %arg1, %c0_i32 : i32, i32, i32
  }
}

</mosaic_0001>

<llo_original>
// kernel: tpu_custom_call.1
$region0: #{tpu_custom_call.1}
  #allocation0 [shape = 'u32[]', space=smem, size = 0x4, offset = 0x4, fixed_abs, tag = 'smem constant byte address 0x4 - core index']
  #allocation1 [shape = 'u32[72,128]{1,0:T(1,128)}', space=vmem, size = 0x9000, scoped, tag = 'internal scratch']
  #allocation2 [shape = 'f32[8,128]{1,0:T(8,128)}', space=vmem, size = 0x1000, scoped, tag = 'scratch operand']
  #allocation3 [shape = 'f32[3,64]{1,0:T(4,128)}', space=vmem, size = 0x800, scoped, tag = 'scratch operand']
  #allocation4 [shape = 'f32[8,8,128]{2,1,0:T(8,128)}', space=vmem, size = 0x8000, scoped, tag = 'scratch operand']
  #allocation5 [shape = 'f32[8,8,128]{2,1,0:T(8,128)}', space=vmem, size = 0x8000, scoped, tag = 'scratch operand']
  #allocation6 [shape = 'f32[8,8,128]{2,1,0:T(8,128)}', space=vmem, size = 0x8000, scoped, tag = 'scratch operand']
  %s0 = inlined_call_operand.vmem [shape: f32[2,8,32], index: 0, kind: input, shape index: {}]
  %s1 = inlined_call_operand.vmem [shape: f32[1,32], index: 1, kind: input, shape index: {}]
  %s2 = inlined_call_operand.hbm [shape: f32[1,32], index: 2, kind: input, shape index: {}]
  %s3 = inlined_call_operand.hbm [shape: bf16[32,128], index: 3, kind: input, shape index: {}]
  %s4 = inlined_call_operand.vmem [shape: f32[4,64], index: 4, kind: input, shape index: {}]
  %s5 = inlined_call_operand.hbm [shape: f32[1,64], index: 5, kind: input, shape index: {}]
  %s6 = inlined_call_operand.vmem [shape: bf16[64,96], index: 6, kind: input, shape index: {}]
  %s7 = inlined_call_operand.hbm [shape: f32[8,128], index: 7, kind: input, shape index: {}]
  %s8 = inlined_call_operand.vmem [shape: f32[1,64], index: 8, kind: input, shape index: {}]
  %s9 = inlined_call_operand.vmem [shape: f32[1,64], index: 9, kind: input, shape index: {}]
  %s10 = inlined_call_operand.vmem [shape: bf16[64,32], index: 10, kind: input, shape index: {}]
  %s11 = inlined_call_operand.hbm [shape: f32[2,8,32], index: 11, kind: output, shape index: {0}]
  %s12 = inlined_call_operand.hbm [shape: f32[2,8,32], index: 12, kind: output, shape index: {1}]
  %13 = xla_tuple %s11, %s12
  %s14 = sld [smem:[#allocation0]]
  $region105: #{tpu_custom_call.1} parent=0
    _
  %s16 = ssub.s32 1, %s14
  %s17 = scalar_select 0, %s16, %s14
  $region1: #{tpu_custom_call.1} parent=0
    #allocation7 [shape = 'u8[512]{0}', space=vmem, size = 0x400, scoped, tag = 'input window, operand 2, single buffered']
    #allocation8 [shape = 's32[2]{0}', space=sflag, size = 0x8, scoped, tag = 'scoped memory for tpu_custom_call.1']
    #allocation9 [shape = 's32[2]{0}', space=sflag, size = 0x8, scoped, tag = 'scoped memory for tpu_custom_call.1']
    #allocation10 [shape = 'u8[8192]{0}', space=vmem, size = 0x2000, scoped, tag = 'input window, operand 3, single buffered']
    #allocation11 [shape = 's32[1]{0}', space=sflag, size = 0x4, scoped, tag = 'scoped memory for tpu_custom_call.1']
    #allocation12 [shape = 'u8[512]{0}', space=vmem, size = 0x400, scoped, tag = 'input window, operand 5, single buffered']
    #allocation13 [shape = 'u8[4096]{0}', space=vmem, size = 0x1000, scoped, tag = 'input window, operand 7, single buffered']
    #allocation14 [shape = 's32[1]{0}', space=sflag, size = 0x4, scoped, tag = 'scoped memory for tpu_custom_call.1']
    #allocation15 [shape = 'u8[8192]{0}', space=vmem, size = 0x2000, scoped, tag = 'output window, operand 0']
    #allocation16 [shape = 'u8[8192]{0}', space=vmem, size = 0x2000, scoped, tag = 'output window, operand 1']
    #allocation17 [shape = 's32[2]{0}', space=sflag, size = 0x8, scoped, tag = 'scoped memory for tpu_custom_call.1']
    %18 = vsyncpa [#allocation8], 0
    %19 = vsyncpa [#allocation11], 0
    %20 = vsyncpa [#allocation14], 0
    %21 = vsyncpa [#allocation9], 0
    %s22 = scalar_lea.sflag [#allocation9], 1
    %23 = vsyncpa %s22, 0
    %24 = vsyncpa [#allocation17], 0
    %s25 = scalar_lea.sflag [#allocation17], 1
    %26 = vsyncpa %s25, 0
    loop: start=0, step=1, limit=4
    $region2: #{tpu_custom_call.1} parent=1 // loop_pre_header
      _
    $region3: #{tpu_custom_call.1} parent=1 // loop_header
      %s28 = sphi 0, %s32
      %p29 = scmp.ge.s32.totalorder %s28, 4
      %s35 = sphi 0, %s47
      %s36 = sphi 0, %s43
      %s37 = sphi 0, %s35
      %s38 = sphi 0, %s36
      %s39 = sphi 0, %s37
      %s40 = sphi 0, %s38
      %s52 = sphi 0, %s54
      %s55 = sphi 0, %s52
      %s56 = sphi 0, %s55
      %s72 = sphi 0, %s56
      %s76 = sphi 0, %s76
      %s78 = sphi 0, %s76
      %s79 = sphi 0, %s78
      %s93 = sphi 0, %s79
      %s97 = sphi 0, %s97
      %s99 = sphi 0, %s97
      %s100 = sphi 0, %s99
      %s114 = sphi 0, %s100
      %s118 = sphi 0, %s118
      %s120 = sphi 0, %s118
      %s121 = sphi 0, %s120
      %s135 = sphi 0, %s121
      %s139 = sphi 0, %s139
      %s141 = sphi 0, %s139
      %s142 = sphi 0, %s141
      %s156 = sphi 0, %s142
      %s160 = sphi 0, %s160
      %s162 = sphi 0, %s160
      %s163 = sphi 0, %s162
      %s177 = sphi 0, %s163
      %s181 = sphi 0, %s181
      %s183 = sphi 0, %s181
      %s184 = sphi 0, %s183
      %s198 = sphi 0, %s184
      %s202 = sphi 0, %s202
      %s204 = sphi 0, %s202
      %s205 = sphi 0, %s204
      %s219 = sphi 0, %s205
      %s223 = sphi 0, %s223
      %s225 = sphi 0, %s223
      %s226 = sphi 0, %s225
      %s240 = sphi 0, %s226
      %s244 = sphi 0, %s244
      %s246 = sphi 0, %s244
      %s247 = sphi 0, %s246
      %s261 = sphi 0, %s247
      %s265 = sphi 0, %s265
      %s267 = sphi 0, %s265
      %s268 = sphi 0, %s267
      %s282 = sphi 0, %s268
      %s290 = sphi 0, %s292
      %s293 = sphi 0, %s290
      %s294 = sphi 0, %s293
      %s310 = sphi 0, %s294
      %s318 = sphi 0, %s320
      %s321 = sphi 0, %s318
      %s322 = sphi 0, %s321
      %s338 = sphi 0, %s322
    $region4: #{tpu_custom_call.1} parent=1 // loop_header_branch
      %31 = sbr.rel (%p29) target = $region8
    $region5: #{tpu_custom_call.1} parent=1 // loop_body
      %s33 = ssub.s32 %s28, 1
      %s34 = ssub.s32 %s28, 2
      %s41 = sadd.s32 1, %s36
      %p42 = scmp.ge.s32.totalorder %s41, 1
      %s43 = scalar_select %p42, 0, %s41
      %s44 = sadd.s32 1, %s35
      %s45 = scalar_select %p42, %s44, %s35
      %p46 = scmp.ge.s32.totalorder %s45, 2
      %s47 = scalar_select %p46, 0, %s45
      %s48 = ssub.s32 %s35, %s47
      %s49 = ssub.s32 %s36, %s43
      %s50 = sor.u32 %s48, %s49
      %p51 = scmp.eq.s32.totalorder %s50, 0
      %s53 = sadd.s32 %s52, 1
      %s54 = scalar_select %p51, %s52, %s53
      %p57 = pneg %p51
      %p58 = scmp.eq.s32.totalorder %s28, 1
      %p59 = por %p57, %p58
      %p60 = scmp.ne.s32.totalorder %s52, %s55
      %p61 = scmp.eq.s32.totalorder %s28, 0
      %p62 = por %p60, %p61
      %p63 = scmp.ne.s32.totalorder %s52, %s55
      %p64 = scmp.eq.s32.totalorder %s33, 1
      %p65 = por %p63, %p64
      %p66 = scmp.ne.s32.totalorder %s55, %s56
      %p67 = scmp.eq.s32.totalorder %s33, 0
      %p68 = por %p66, %p67
      %p69 = scmp.ne.s32.totalorder %s55, %s56
      %p70 = scmp.eq.s32.totalorder %s34, 1
      %p71 = por %p69, %p70
      %p73 = scmp.ne.s32.totalorder %s56, %s72
      %p74 = scmp.eq.s32.totalorder %s34, 0
      %p75 = por %p73, %p74
      %s77 = sadd.s32 %s76, 1
      %p80 = scmp.eq.s32.totalorder %s28, 1
      %p81 = scmp.ne.s32.totalorder %s76, %s78
      %p82 = scmp.eq.s32.totalorder %s28, 0
      %p83 = por %p81, %p82
      %p84 = scmp.ne.s32.totalorder %s76, %s78
      %p85 = scmp.eq.s32.totalorder %s33, 1
      %p86 = por %p84, %p85
      %p87 = scmp.ne.s32.totalorder %s78, %s79
      %p88 = scmp.eq.s32.totalorder %s33, 0
      %p89 = por %p87, %p88
      %p90 = scmp.ne.s32.totalorder %s78, %s79
      %p91 = scmp.eq.s32.totalorder %s34, 1
      %p92 = por %p90, %p91
      %p94 = scmp.ne.s32.totalorder %s79, %s93
      %p95 = scmp.eq.s32.totalorder %s34, 0
      %p96 = por %p94, %p95
      %s98 = sadd.s32 %s97, 1
      %p101 = scmp.eq.s32.totalorder %s28, 1
      %p102 = scmp.ne.s32.totalorder %s97, %s99
      %p103 = scmp.eq.s32.totalorder %s28, 0
      %p104 = por %p102, %p103
      %p105 = scmp.ne.s32.totalorder %s97, %s99
      %p106 = scmp.eq.s32.totalorder %s33, 1
      %p107 = por %p105, %p106
      %p108 = scmp.ne.s32.totalorder %s99, %s100
      %p109 = scmp.eq.s32.totalorder %s33, 0
      %p110 = por %p108, %p109
      %p111 = scmp.ne.s32.totalorder %s99, %s100
      %p112 = scmp.eq.s32.totalorder %s34, 1
      %p113 = por %p111, %p112
      %p115 = scmp.ne.s32.totalorder %s100, %s114
      %p116 = scmp.eq.s32.totalorder %s34, 0
      %p117 = por %p115, %p116
      %s119 = sadd.s32 %s118, 1
      %p122 = scmp.eq.s32.totalorder %s28, 1
      %p123 = scmp.ne.s32.totalorder %s118, %s120
      %p124 = scmp.eq.s32.totalorder %s28, 0
      %p125 = por %p123, %p124
      %p126 = scmp.ne.s32.totalorder %s118, %s120
      %p127 = scmp.eq.s32.totalorder %s33, 1
      %p128 = por %p126, %p127
      %p129 = scmp.ne.s32.totalorder %s120, %s121
      %p130 = scmp.eq.s32.totalorder %s33, 0
      %p131 = por %p129, %p130
      %p132 = scmp.ne.s32.totalorder %s120, %s121
      %p133 = scmp.eq.s32.totalorder %s34, 1
      %p134 = por %p132, %p133
      %p136 = scmp.ne.s32.totalorder %s121, %s135
      %p137 = scmp.eq.s32.totalorder %s34, 0
      %p138 = por %p136, %p137
      %s140 = sadd.s32 %s139, 1
      %p143 = scmp.eq.s32.totalorder %s28, 1
      %p144 = scmp.ne.s32.totalorder %s139, %s141
      %p145 = scmp.eq.s32.totalorder %s28, 0
      %p146 = por %p144, %p145
      %p147 = scmp.ne.s32.totalorder %s139, %s141
      %p148 = scmp.eq.s32.totalorder %s33, 1
      %p149 = por %p147, %p148
      %p150 = scmp.ne.s32.totalorder %s141, %s142
      %p151 = scmp.eq.s32.totalorder %s33, 0
      %p152 = por %p150, %p151
      %p153 = scmp.ne.s32.totalorder %s141, %s142
      %p154 = scmp.eq.s32.totalorder %s34, 1
      %p155 = por %p153, %p154
      %p157 = scmp.ne.s32.totalorder %s142, %s156
      %p158 = scmp.eq.s32.totalorder %s34, 0
      %p159 = por %p157, %p158
      %s161 = sadd.s32 %s160, 1
      %p164 = scmp.eq.s32.totalorder %s28, 1
      %p165 = scmp.ne.s32.totalorder %s160, %s162
      %p166 = scmp.eq.s32.totalorder %s28, 0
      %p167 = por %p165, %p166
      %p168 = scmp.ne.s32.totalorder %s160, %s162
      %p169 = scmp.eq.s32.totalorder %s33, 1
      %p170 = por %p168, %p169
      %p171 = scmp.ne.s32.totalorder %s162, %s163
      %p172 = scmp.eq.s32.totalorder %s33, 0
      %p173 = por %p171, %p172
      %p174 = scmp.ne.s32.totalorder %s162, %s163
      %p175 = scmp.eq.s32.totalorder %s34, 1
      %p176 = por %p174, %p175
      %p178 = scmp.ne.s32.totalorder %s163, %s177
      %p179 = scmp.eq.s32.totalorder %s34, 0
      %p180 = por %p178, %p179
      %s182 = sadd.s32 %s181, 1
      %p185 = scmp.eq.s32.totalorder %s28, 1
      %p186 = scmp.ne.s32.totalorder %s181, %s183
      %p187 = scmp.eq.s32.totalorder %s28, 0
      %p188 = por %p186, %p187
      %p189 = scmp.ne.s32.totalorder %s181, %s183
      %p190 = scmp.eq.s32.totalorder %s33, 1
      %p191 = por %p189, %p190
      %p192 = scmp.ne.s32.totalorder %s183, %s184
      %p193 = scmp.eq.s32.totalorder %s33, 0
      %p194 = por %p192, %p193
      %p195 = scmp.ne.s32.totalorder %s183, %s184
      %p196 = scmp.eq.s32.totalorder %s34, 1
      %p197 = por %p195, %p196
      %p199 = scmp.ne.s32.totalorder %s184, %s198
      %p200 = scmp.eq.s32.totalorder %s34, 0
      %p201 = por %p199, %p200
      %s203 = sadd.s32 %s202, 1
      %p206 = scmp.eq.s32.totalorder %s28, 1
      %p207 = scmp.ne.s32.totalorder %s202, %s204
      %p208 = scmp.eq.s32.totalorder %s28, 0
      %p209 = por %p207, %p208
      %p210 = scmp.ne.s32.totalorder %s202, %s204
      %p211 = scmp.eq.s32.totalorder %s33, 1
      %p212 = por %p210, %p211
      %p213 = scmp.ne.s32.totalorder %s204, %s205
      %p214 = scmp.eq.s32.totalorder %s33, 0
      %p215 = por %p213, %p214
      %p216 = scmp.ne.s32.totalorder %s204, %s205
      %p217 = scmp.eq.s32.totalorder %s34, 1
      %p218 = por %p216, %p217
      %p220 = scmp.ne.s32.totalorder %s205, %s219
      %p221 = scmp.eq.s32.totalorder %s34, 0
      %p222 = por %p220, %p221
      %s224 = sadd.s32 %s223, 1
      %p227 = scmp.eq.s32.totalorder %s28, 1
      %p228 = scmp.ne.s32.totalorder %s223, %s225
      %p229 = scmp.eq.s32.totalorder %s28, 0
      %p230 = por %p228, %p229
      %p231 = scmp.ne.s32.totalorder %s223, %s225
      %p232 = scmp.eq.s32.totalorder %s33, 1
      %p233 = por %p231, %p232
      %p234 = scmp.ne.s32.totalorder %s225, %s226
      %p235 = scmp.eq.s32.totalorder %s33, 0
      %p236 = por %p234, %p235
      %p237 = scmp.ne.s32.totalorder %s225, %s226
      %p238 = scmp.eq.s32.totalorder %s34, 1
      %p239 = por %p237, %p238
      %p241 = scmp.ne.s32.totalorder %s226, %s240
      %p242 = scmp.eq.s32.totalorder %s34, 0
      %p243 = por %p241, %p242
      %s245 = sadd.s32 %s244, 1
      %p248 = scmp.eq.s32.totalorder %s28, 1
      %p249 = scmp.ne.s32.totalorder %s244, %s246
      %p250 = scmp.eq.s32.totalorder %s28, 0
      %p251 = por %p249, %p250
      %p252 = scmp.ne.s32.totalorder %s244, %s246
      %p253 = scmp.eq.s32.totalorder %s33, 1
      %p254 = por %p252, %p253
      %p255 = scmp.ne.s32.totalorder %s246, %s247
      %p256 = scmp.eq.s32.totalorder %s33, 0
      %p257 = por %p255, %p256
      %p258 = scmp.ne.s32.totalorder %s246, %s247
      %p259 = scmp.eq.s32.totalorder %s34, 1
      %p260 = por %p258, %p259
      %p262 = scmp.ne.s32.totalorder %s247, %s261
      %p263 = scmp.eq.s32.totalorder %s34, 0
      %p264 = por %p262, %p263
      %s266 = sadd.s32 %s265, 1
      %p269 = scmp.eq.s32.totalorder %s28, 1
      %p270 = scmp.ne.s32.totalorder %s265, %s267
      %p271 = scmp.eq.s32.totalorder %s28, 0
      %p272 = por %p270, %p271
      %p273 = scmp.ne.s32.totalorder %s265, %s267
      %p274 = scmp.eq.s32.totalorder %s33, 1
      %p275 = por %p273, %p274
      %p276 = scmp.ne.s32.totalorder %s267, %s268
      %p277 = scmp.eq.s32.totalorder %s33, 0
      %p278 = por %p276, %p277
      %p279 = scmp.ne.s32.totalorder %s267, %s268
      %p280 = scmp.eq.s32.totalorder %s34, 1
      %p281 = por %p279, %p280
      %p283 = scmp.ne.s32.totalorder %s268, %s282
      %p284 = scmp.eq.s32.totalorder %s34, 0
      %p285 = por %p283, %p284
      %s286 = ssub.s32 %s35, %s47
      %s287 = ssub.s32 %s36, %s43
      %s288 = sor.u32 %s286, %s287
      %p289 = scmp.eq.s32.totalorder %s288, 0
      %s291 = sadd.s32 %s290, 1
      %s292 = scalar_select %p289, %s290, %s291
      %p295 = pneg %p289
      %p296 = scmp.eq.s32.totalorder %s28, 1
      %p297 = por %p295, %p296
      %p298 = scmp.ne.s32.totalorder %s290, %s293
      %p299 = scmp.eq.s32.totalorder %s28, 0
      %p300 = por %p298, %p299
      %p301 = scmp.ne.s32.totalorder %s290, %s293
      %p302 = scmp.eq.s32.totalorder %s33, 1
      %p303 = por %p301, %p302
      %p304 = scmp.ne.s32.totalorder %s293, %s294
      %p305 = scmp.eq.s32.totalorder %s33, 0
      %p306 = por %p304, %p305
      %p307 = scmp.ne.s32.totalorder %s293, %s294
      %p308 = scmp.eq.s32.totalorder %s34, 1
      %p309 = por %p307, %p308
      %p311 = scmp.ne.s32.totalorder %s294, %s310
      %p312 = scmp.eq.s32.totalorder %s34, 0
      %p313 = por %p311, %p312
      %s314 = ssub.s32 %s35, %s47
      %s315 = ssub.s32 %s36, %s43
      %s316 = sor.u32 %s314, %s315
      %p317 = scmp.eq.s32.totalorder %s316, 0
      %s319 = sadd.s32 %s318, 1
      %s320 = scalar_select %p317, %s318, %s319
      %p323 = pneg %p317
      %p324 = scmp.eq.s32.totalorder %s28, 1
      %p325 = por %p323, %p324
      %p326 = scmp.ne.s32.totalorder %s318, %s321
      %p327 = scmp.eq.s32.totalorder %s28, 0
      %p328 = por %p326, %p327
      %p329 = scmp.ne.s32.totalorder %s318, %s321
      %p330 = scmp.eq.s32.totalorder %s33, 1
      %p331 = por %p329, %p330
      %p332 = scmp.ne.s32.totalorder %s321, %s322
      %p333 = scmp.eq.s32.totalorder %s33, 0
      %p334 = por %p332, %p333
      %p335 = scmp.ne.s32.totalorder %s321, %s322
      %p336 = scmp.eq.s32.totalorder %s34, 1
      %p337 = por %p335, %p336
      %p339 = scmp.ne.s32.totalorder %s322, %s338
      %p340 = scmp.eq.s32.totalorder %s34, 0
      %p341 = por %p339, %p340
      %p342 = scmp.le.s32.totalorder 1, %s28
      %p343 = scmp.lt.s32.totalorder %s28, 3
      %p344 = pnand %p342, %p343
      %p345 = pneg %p344
      // Predicated region
      $region9: #{tpu_custom_call.1} parent=5 // pred_check
        _
      $region10: #{tpu_custom_call.1} parent=5 // pred_check_branch
        %347 = sbr.rel (%p344) target = $region12
      $region11: #{tpu_custom_call.1} parent=5 // pred_region
        %s348 = ssub.s32 %s28, 1
        // Predicated region
        $region13: #{tpu_custom_call.1} parent=11 // pred_check
          %p349 = pneg %p89
        $region14: #{tpu_custom_call.1} parent=11 // pred_check_branch
          %351 = sbr.rel (%p349) target = $region16
        $region15: #{tpu_custom_call.1} parent=11 // pred_region
          _
        $region16: #{tpu_custom_call.1} parent=11 // pred_fallthru
          _
        // Predicated region
        $region17: #{tpu_custom_call.1} parent=11 // pred_check
          %p352 = pneg %p110
        $region18: #{tpu_custom_call.1} parent=11 // pred_check_branch
          %354 = sbr.rel (%p352) target = $region20
        $region19: #{tpu_custom_call.1} parent=11 // pred_region
          %356 = vsyncadd [#allocation8], 0
          %s358 = sshll.u32 %s2, 4
          %s359 = int_to_ptr.hbm [resolvable:$true] %s358
          %s360 = sshll.u32 [#allocation7], 4
          %s361 = int_to_ptr.vmem [resolvable:$true] %s360
          %363 = dma.hbm_to_vmem [thread:$0]  %s359, 16, %s361, [#allocation8]
        $region20: #{tpu_custom_call.1} parent=11 // pred_fallthru
          _
        // Predicated region
        $region21: #{tpu_custom_call.1} parent=11 // pred_check
          %p364 = pneg %p131
        $region22: #{tpu_custom_call.1} parent=11 // pred_check_branch
          %366 = sbr.rel (%p364) target = $region24
        $region23: #{tpu_custom_call.1} parent=11 // pred_region
          %368 = vsyncadd [#allocation11], 0
          %s369 = sshll.u32 %s3, 4
          %s370 = int_to_ptr.hbm [resolvable:$true] %s369
          %s371 = sshll.u32 [#allocation10], 4
          %s372 = int_to_ptr.vmem [resolvable:$true] %s371
          %377 = dma.hbm_to_vmem [thread:$0]  %s370, 256, %s372, [#allocation11], 64, 64, 4
        $region24: #{tpu_custom_call.1} parent=11 // pred_fallthru
          _
        // Predicated region
        $region25: #{tpu_custom_call.1} parent=11 // pred_check
          %p378 = pneg %p152
        $region26: #{tpu_custom_call.1} parent=11 // pred_check_branch
          %380 = sbr.rel (%p378) target = $region28
        $region27: #{tpu_custom_call.1} parent=11 // pred_region
          _
        $region28: #{tpu_custom_call.1} parent=11 // pred_fallthru
          _
        // Predicated region
        $region29: #{tpu_custom_call.1} parent=11 // pred_check
          %p381 = pneg %p173
        $region30: #{tpu_custom_call.1} parent=11 // pred_check_branch
          %383 = sbr.rel (%p381) target = $region32
        $region31: #{tpu_custom_call.1} parent=11 // pred_region
          %385 = vsyncadd [#allocation11], 0
          %s387 = sshll.u32 %s5, 4
          %s388 = int_to_ptr.hbm [resolvable:$true] %s387
          %s389 = sshll.u32 [#allocation12], 4
          %s390 = int_to_ptr.vmem [resolvable:$true] %s389
          %392 = dma.hbm_to_vmem [thread:$0]  %s388, 16, %s390, [#allocation11]
        $region32: #{tpu_custom_call.1} parent=11 // pred_fallthru
          _
        // Predicated region
        $region33: #{tpu_custom_call.1} parent=11 // pred_check
          %p393 = pneg %p194
        $region34: #{tpu_custom_call.1} parent=11 // pred_check_branch
          %395 = sbr.rel (%p393) target = $region36
        $region35: #{tpu_custom_call.1} parent=11 // pred_region
          _
        $region36: #{tpu_custom_call.1} parent=11 // pred_fallthru
          _
        // Predicated region
        $region37: #{tpu_custom_call.1} parent=11 // pred_check
          %p396 = pneg %p215
        $region38: #{tpu_custom_call.1} parent=11 // pred_check_branch
          %398 = sbr.rel (%p396) target = $region40
        $region39: #{tpu_custom_call.1} parent=11 // pred_region
          %400 = vsyncadd [#allocation14], 0
          %s402 = sshll.u32 %s7, 4
          %s403 = int_to_ptr.hbm [resolvable:$true] %s402
          %s404 = sshll.u32 [#allocation13], 4
          %s405 = int_to_ptr.vmem [resolvable:$true] %s404
          %407 = dma.hbm_to_vmem [thread:$0]  %s403, 128, %s405, [#allocation14]
        $region40: #{tpu_custom_call.1} parent=11 // pred_fallthru
          _
        // Predicated region
        $region41: #{tpu_custom_call.1} parent=11 // pred_check
          %p408 = pneg %p236
        $region42: #{tpu_custom_call.1} parent=11 // pred_check_branch
          %410 = sbr.rel (%p408) target = $region44
        $region43: #{tpu_custom_call.1} parent=11 // pred_region
          _
        $region44: #{tpu_custom_call.1} parent=11 // pred_fallthru
          _
        // Predicated region
        $region45: #{tpu_custom_call.1} parent=11 // pred_check
          %p411 = pneg %p257
        $region46: #{tpu_custom_call.1} parent=11 // pred_check_branch
          %413 = sbr.rel (%p411) target = $region48
        $region47: #{tpu_custom_call.1} parent=11 // pred_region
          _
        $region48: #{tpu_custom_call.1} parent=11 // pred_fallthru
          _
        // Predicated region
        $region49: #{tpu_custom_call.1} parent=11 // pred_check
          %p414 = pneg %p278
        $region50: #{tpu_custom_call.1} parent=11 // pred_check_branch
          %416 = sbr.rel (%p414) target = $region52
        $region51: #{tpu_custom_call.1} parent=11 // pred_region
          _
        $region52: #{tpu_custom_call.1} parent=11 // pred_fallthru
          _
      $region12: #{tpu_custom_call.1} parent=5 // pred_fallthru
        _
      %p417 = scmp.lt.s32.totalorder %s28, 2
      // Predicated region
      $region53: #{tpu_custom_call.1} parent=5 // pred_check
        %p418 = pneg %p417
      $region54: #{tpu_custom_call.1} parent=5 // pred_check_branch
        %420 = sbr.rel (%p418) target = $region56
      $region55: #{tpu_custom_call.1} parent=5 // pred_region
        // Predicated region
        $region57: #{tpu_custom_call.1} parent=55 // pred_check
          %p421 = pneg %p62
        $region58: #{tpu_custom_call.1} parent=55 // pred_check_branch
          %423 = sbr.rel (%p421) target = $region60
        $region59: #{tpu_custom_call.1} parent=55 // pred_region
          %p424 = scmp.lt.s32.totalorder %s35, 1
          %s425 = scalar_select %p424, %s35, 1
          %p426 = scmp.lt.s32.totalorder %s36, 0
          %s427 = scalar_select %p426, %s36, 0
          %s428 = sadd.s32 %s427, %s425
          %s429 = smul.addr %s428, 8
          %s430 = scalar_lea.vmem %s0, %s429
        $region60: #{tpu_custom_call.1} parent=55 // pred_fallthru
          _
      $region56: #{tpu_custom_call.1} parent=5 // pred_fallthru
        _
      %p431 = scmp.le.s32.totalorder 1, %s28
      %p432 = scmp.lt.s32.totalorder %s28, 3
      %p433 = pnand %p431, %p432
      %p434 = pneg %p433
      // Predicated region
      $region61: #{tpu_custom_call.1} parent=5 // pred_check
        _
      $region62: #{tpu_custom_call.1} parent=5 // pred_check_branch
        %436 = sbr.rel (%p433) target = $region64
      $region63: #{tpu_custom_call.1} parent=5 // pred_region
        %s437 = ssub.s32 %s28, 1
        // Predicated region
        $region65: #{tpu_custom_call.1} parent=63 // pred_check
          %p438 = pneg %p110
        $region66: #{tpu_custom_call.1} parent=63 // pred_check_branch
          %440 = sbr.rel (%p438) target = $region68
        $region67: #{tpu_custom_call.1} parent=63 // pred_region
          %442 = dma.done [#allocation8], 16
        $region68: #{tpu_custom_call.1} parent=63 // pred_fallthru
          _
        // Predicated region
        $region69: #{tpu_custom_call.1} parent=63 // pred_check
          %p443 = pneg %p131
        $region70: #{tpu_custom_call.1} parent=63 // pred_check_branch
          %445 = sbr.rel (%p443) target = $region72
        $region71: #{tpu_custom_call.1} parent=63 // pred_region
          %447 = dma.done [#allocation11], 256
        $region72: #{tpu_custom_call.1} parent=63 // pred_fallthru
          _
        // Predicated region
        $region73: #{tpu_custom_call.1} parent=63 // pred_check
          %p448 = pneg %p173
        $region74: #{tpu_custom_call.1} parent=63 // pred_check_branch
          %450 = sbr.rel (%p448) target = $region76
        $region75: #{tpu_custom_call.1} parent=63 // pred_region
          %452 = dma.done [#allocation11], 16
        $region76: #{tpu_custom_call.1} parent=63 // pred_fallthru
          _
        // Predicated region
        $region77: #{tpu_custom_call.1} parent=63 // pred_check
          %p453 = pneg %p215
        $region78: #{tpu_custom_call.1} parent=63 // pred_check_branch
          %455 = sbr.rel (%p453) target = $region80
        $region79: #{tpu_custom_call.1} parent=63 // pred_region
          %457 = dma.done [#allocation14], 128
        $region80: #{tpu_custom_call.1} parent=63 // pred_fallthru
          _
        %p458 = scmp.lt.s32.totalorder %s37, 1
        %s459 = scalar_select %p458, %s37, 1
        %p460 = scmp.lt.s32.totalorder %s38, 0
        %s461 = scalar_select %p460, %s38, 0
        %s462 = sadd.s32 %s461, %s459
        %s463 = smul.addr %s462, 8
        %s464 = scalar_lea.vmem %s0, %s463
        %p465 = pneg %p68
        %p466 = pneg %p65
        %p467 = pneg %p89
        %p468 = pneg %p86
        %p469 = pneg %p110
        %p470 = pneg %p107
        %p471 = pneg %p131
        %p472 = pneg %p128
        %p473 = pneg %p152
        %p474 = pneg %p149
        %p475 = pneg %p173
        %p476 = pneg %p170
        %p477 = pneg %p194
        %p478 = pneg %p191
        %p479 = pneg %p215
        %p480 = pneg %p212
        %p481 = pneg %p236
        %p482 = pneg %p233
        %p483 = pneg %p257
        %p484 = pneg %p254
        %p485 = pneg %p278
        %p486 = pneg %p275
        %p487 = pneg %p306
        %p488 = pneg %p303
        %s489 = sand.u32 %s293, 1
        %s490 = scalar_lea.sflag [#allocation9], %s489
        %s491 = sand.u32 %s293, 1
        %s492 = smul.addr %s491, 8
        %s493 = scalar_lea.vmem [#allocation15], %s492
        %p494 = pneg %p334
        %p495 = pneg %p331
        %s496 = sand.u32 %s321, 1
        %s497 = scalar_lea.sflag [#allocation17], %s496
        %s498 = sand.u32 %s321, 1
        %s499 = smul.addr %s498, 8
        %s500 = scalar_lea.vmem [#allocation16], %s499
        %p501 = scmp.lt.s32.totalorder %s37, 1
        %s502 = scalar_select %p501, %s37, 1
        %p503 = scmp.lt.s32.totalorder %s38, 0
        %s504 = scalar_select %p503, %s38, 0
        %s505 = sadd.s32 %s504, %s502
        %s506 = smul.addr %s505, 8
        %s507 = scalar_lea.vmem %s0, %s506
        %p509 = scmp.eq.s32.totalorder %s38, 0
        // Predicated region
        $region81: #{tpu_custom_call.1} parent=63 // pred_check
          %p510 = pneg %p509
        $region82: #{tpu_custom_call.1} parent=63 // pred_check_branch
          %512 = sbr.rel (%p510) target = $region84
        $region83: #{tpu_custom_call.1} parent=63 // pred_region
          %513 = vst [vmem:[#allocation2] sm:$0xff] 0.0
          %vm514 = vcmask 518144
          %515 = vst.msk [vmem:[#allocation3] sm:$0x7] %vm514, 0.0
        $region84: #{tpu_custom_call.1} parent=63 // pred_fallthru
          _
        %v516 = vld [vmem:[%s507] sm:$0xff]
        %vm517 = vcmask 261120
        %518 = vst.msk [vmem:[%s500] sm:$0xff] %vm517, %v516
        %v519 = vsel %vm517, %v516, 0.0
        %520 = vadd.xlane.f32.xlu0 %v519
        %v521 = vpop.xlane.xlu0 %520
        %v522 = vrcp.pop 32.0
        %v523 = vmul.f32 32.0, %v522
        %v524 = vsub.f32 1.0, %v523
        %v525 = vmul.f32 %v522, %v524
        %v526 = vadd.f32 %v522, %v525
        %vm527 = vweird.f32 %v522
        %v528 = vsel %vm527, %v522, %v526
        %v529 = vmul.f32 %v521, %v528
        %v530 = vsub.f32 %v516, %v529
        %v531 = vmul.f32 %v530, %v530
        %v532 = vsel %vm517, %v531, 0.0
        %533 = vadd.xlane.f32.xlu0 %v532
        %v534 = vpop.xlane.xlu0 %533
        %v535 = vmul.f32 %v534, %v528
        %v536 = vadd.f32 %v535, 1e-05
        %v537 = vrsqrt.pop %v536
        %v538 = vmul.f32 %v537, %v536
        %v539 = vmul.f32 %v538, %v537
        %v540 = vmul.f32 0.5, %v539
        %v541 = vsub.f32 1.5, %v540
        %v542 = vmul.f32 %v537, %v541
        %vm543 = vweird.f32 %v536
        %vm544 = vweird.f32 %v537
        %vm545 = vmor %vm543, %vm544
        %v546 = vsel %vm545, %v537, %v542
        %v547 = vmul.f32 %v530, %v546
        %v548 = vld [vmem:[%s1] sm:$0x1]
        %v550 = vperm.slane %v548, 0
        %v552 = vmul.f32 %v547, %v550
        %v553 = vld [vmem:[#allocation7] sm:$0x1]
        %v555 = vperm.slane %v553, 0
        %v557 = vadd.f32 %v552, %v555
        %v558 = vpack.c.bf16 %v557, %v557
        %v559 = vld [vmem:[#allocation10] sm:$0xf]
        %v560 = vld [vmem:[#allocation10 + $0x4] sm:$0xf]
        %v561 = vld [vmem:[#allocation10 + $0x8] sm:$0xf]
        %v562 = vld [vmem:[#allocation10 + $0xc] sm:$0xf]
        %v567 = vunpack.c.l.b16 %v559
        %v568 = vunpack.c.l.b16 %v560
        %v569 = vunpack.c.l.b16 %v561
        %v570 = vunpack.c.l.b16 %v562
        %v571 = vpack.c.b16 %v568, %v567
        %v572 = vpack.c.b16 %v570, %v569
        %v576 = vsel %vm517, %v558, 0
        %578 = vmatpush.bf16.msra.mxu0 0
        %579 = vmatpush.bf16.msra.mxu0 0
        %580 = vmatpush.bf16.msra.mxu0 0
        %581 = vmatpush.bf16.msra.mxu0 0
        %582 = vmatpush.bf16.msra.mxu0 0
        %583 = vmatpush.bf16.msra.mxu0 0
        %584 = vmatpush.bf16.msra.mxu0 %v572
        %585 = vmatpush.bf16.msra.mxu0 %v571
        %586 = vmatmul.bf16.gmra.mxu0 %v576
        %v587 = vpop.f32.mrf.mxu0
        %v588 = vadd.f32 0.0, %v587
        %v589 = vpop.f32.mrf.mxu0
        %590 = vdwg.mxu0
        %v591 = vld [vmem:[#allocation3] sm:$0x7]
        %v593 = vrot.slane %v588, 5
        %vm595 = vcmask 1042432
        %v596 = vsel %vm595, %v591, %v593
        %vm597 = vcmask 523269
        %598 = vst.msk [vmem:[#allocation3 - $0x5] sm:$0xe0] %vm597, %v588
        %v599 = vld [vmem:[#allocation12] sm:$0x1]
        %v601 = vperm.slane %v599, 0
        %v603 = vadd.f32 %v601, 0.0
        %v604 = vld [vmem:[%s4] sm:$0xf]
        %v605 = vperm.slane %v604, 0
        %v606 = vmul.f32 %v596, %v605
        %v607 = vadd.f32 %v603, %v606
        %v608 = vperm.slane %v604, 1
        %v609 = vmul.f32 %v596, %v608
        %v610 = vmul.f32 %v593, %v608
        %vm613 = vcmask 1046528
        %v614 = vrot.slane %v609, 1
        %v615 = vrot.slane %v610, 1
        %v616 = vsel %vm613, %v614, %v615
        %v618 = vadd.f32 %v607, %v616
        %v619 = vperm.slane %v604, 2
        %v620 = vmul.f32 %v596, %v619
        %v621 = vmul.f32 %v593, %v619
        %vm624 = vcmask 1045504
        %v625 = vrot.slane %v620, 2
        %v626 = vrot.slane %v621, 2
        %v627 = vsel %vm624, %v625, %v626
        %v629 = vadd.f32 %v618, %v627
        %v630 = vperm.slane %v604, 3
        %v631 = vmul.f32 %v596, %v630
        %v632 = vmul.f32 %v593, %v630
        %vm635 = vcmask 1044480
        %v636 = vrot.slane %v631, 3
        %v637 = vrot.slane %v632, 3
        %v638 = vsel %vm635, %v636, %v637
        %v640 = vadd.f32 %v629, %v638
        %v641 = vxor.u32 %v640, 2147483648
        %v642 = vmul.f32 %v641, 1.442695
        %v643 = vpow.pop %v642
        %v644 = vadd.f32 %v643, 1.0
        %v645 = vrcp.pop %v644
        %v646 = vmul.f32 %v644, %v645
        %v647 = vsub.f32 1.0, %v646
        %v648 = vmul.f32 %v645, %v647
        %v649 = vadd.f32 %v645, %v648
        %vm650 = vweird.f32 %v644
        %vm651 = vweird.f32 %v645
        %vm652 = vmor %vm650, %vm651
        %v653 = vsel %vm652, %v645, %v649
        %v654 = vand.u32 2147483647, %v644
        %vm655 = vcmp.eq.f32.partialorder %v654, 8.507059e+37
        %v656 = vand.u32 %v644, 2147483648
        %v657 = vor.u32 1.1754944e-38, %v656
        %v658 = vsel %vm655, %v657, %v653
        %v659 = vmul.f32 1.0, %v658
        %v660 = vmul.f32 %v640, %v659
        %v661 = vpack.c.bf16 %v660, %v660
        %v662 = vld [vmem:[%s6] sm:$0xf]
        %v663 = vld [vmem:[%s6 + $0x4] sm:$0xf]
        %v664 = vld [vmem:[%s6 + $0x8] sm:$0xf]
        %v665 = vld [vmem:[%s6 + $0xc] sm:$0xf]
        %v666 = vld [vmem:[%s6 + $0x10] sm:$0xf]
        %v667 = vld [vmem:[%s6 + $0x14] sm:$0xf]
        %v668 = vld [vmem:[%s6 + $0x18] sm:$0xf]
        %v669 = vld [vmem:[%s6 + $0x1c] sm:$0xf]
        %v678 = vunpack.c.l.b16 %v662
        %v679 = vunpack.c.l.b16 %v663
        %v680 = vunpack.c.l.b16 %v664
        %v681 = vunpack.c.l.b16 %v665
        %v682 = vunpack.c.l.b16 %v666
        %v683 = vunpack.c.l.b16 %v667
        %v684 = vunpack.c.l.b16 %v668
        %v685 = vunpack.c.l.b16 %v669
        %v686 = vpack.c.b16 %v679, %v678
        %v687 = vpack.c.b16 %v681, %v680
        %v688 = vpack.c.b16 %v683, %v682
        %v689 = vpack.c.b16 %v685, %v684
        %vm694 = vcmask 523264
        %v696 = vsel %vm694, %v661, 0
        %698 = vmatpush.bf16.msra.mxu0 0
        %699 = vmatpush.bf16.msra.mxu0 0
        %700 = vmatpush.bf16.msra.mxu0 0
        %701 = vmatpush.bf16.msra.mxu0 0
        %702 = vmatpush.bf16.msra.mxu0 %v689
        %703 = vmatpush.bf16.msra.mxu0 %v688
        %704 = vmatpush.bf16.msra.mxu0 %v687
        %705 = vmatpush.bf16.msra.mxu0 %v686
        %706 = vmatmul.bf16.gmra.mxu0 %v696
        %v707 = vpop.f32.mrf.mxu0
        %v708 = vadd.f32 0.0, %v707
        %v709 = vpop.f32.mrf.mxu0
        %710 = vdwg.mxu0
        %v711 = vld [vmem:[%s9] sm:$0x1]
        %v713 = vperm.slane %v711, 0
        %v715 = vadd.f32 %v708, %v713
        %v716 = vmax.f32 %v715, 0.0
        %vm717 = vcmp.ne.f32.partialorder %v715, %v715
        %v718 = vadd.f32 %v715, 0.0
        %v719 = vand.u32 2147483647, %v715
        %v720 = vsub.f32 0.0, %v719
        %v721 = vmul.f32 %v720, 1.442695
        %v722 = vpow.pop %v721
        %v723 = vadd.f32 %v722, 1.0
        %v724 = vlog2.pop %v723
        %v725 = vmul.f32 %v724, 0.6931472
        %v726 = vmul.f32 -0.5, %v722
        %v727 = vadd.f32 %v726, 1.0
        %v728 = vmul.f32 %v727, %v722
        %v729 = vand.u32 2147483647, %v722
        %vm730 = vcmp.lt.f32.partialorder %v729, 0.0004427343
        %v731 = vsel %vm730, %v728, %v725
        %v732 = vadd.f32 %v716, %v731
        %v733 = vsel %vm717, %v718, %v732
        %v734 = vmul.f32 %v733, %v660
        %736 = vrot.lane.b32.xlu0 %v733, 64
        %v737 = vpop.permute.xlu0 %736
        %v739 = vsel %vm694, %v733, %v737
        %v741 = vrot.slane %v739, 1
        %v742 = vrot.slane %v739, 2
        %v743 = vrot.slane %v739, 3
        %v744 = vrot.slane %v739, 4
        %v745 = vrot.slane %v739, 5
        %v746 = vrot.slane %v739, 6
        %v747 = vrot.slane %v739, 7
        %v748 = vld [vmem:[#allocation13] sm:$0xff]
        %v749 = vperm.slane %v739, 0
        %v750 = vperm.slane %v741, 0
        %v751 = vperm.slane %v742, 0
        %v752 = vperm.slane %v743, 0
        %v753 = vperm.slane %v744, 0
        %v754 = vperm.slane %v745, 0
        %v755 = vperm.slane %v746, 0
        %v756 = vperm.slane %v747, 0
        %v765 = vmul.f32 %v749, %v748
        %v766 = vmul.f32 %v750, %v748
        %v767 = vmul.f32 %v751, %v748
        %v768 = vmul.f32 %v752, %v748
        %v769 = vmul.f32 %v753, %v748
        %v770 = vmul.f32 %v754, %v748
        %v771 = vmul.f32 %v755, %v748
        %v772 = vmul.f32 %v756, %v748
        %v773 = vsub.f32 0.0, %v765
        %v774 = vsub.f32 0.0, %v766
        %v775 = vsub.f32 0.0, %v767
        %v776 = vsub.f32 0.0, %v768
        %v777 = vsub.f32 0.0, %v769
        %v778 = vsub.f32 0.0, %v770
        %v779 = vsub.f32 0.0, %v771
        %v780 = vsub.f32 0.0, %v772
        %v781 = vmul.f32 %v773, 1.442695
        %v782 = vpow.pop %v781
        %v783 = vmul.f32 %v774, 1.442695
        %v784 = vpow.pop %v783
        %v785 = vmul.f32 %v775, 1.442695
        %v786 = vpow.pop %v785
        %v787 = vmul.f32 %v776, 1.442695
        %v788 = vpow.pop %v787
        %v789 = vmul.f32 %v777, 1.442695
        %v790 = vpow.pop %v789
        %v791 = vmul.f32 %v778, 1.442695
        %v792 = vpow.pop %v791
        %v793 = vmul.f32 %v779, 1.442695
        %v794 = vpow.pop %v793
        %v795 = vmul.f32 %v780, 1.442695
        %v796 = vpow.pop %v795
        %797 = vst [vmem:[#allocation4] sm:$0xff] %v782
        %798 = vst [vmem:[#allocation4 + $0x8] sm:$0xff] %v784
        %799 = vst [vmem:[#allocation4 + $0x10] sm:$0xff] %v786
        %800 = vst [vmem:[#allocation4 + $0x18] sm:$0xff] %v788
        %801 = vst [vmem:[#allocation4 + $0x20] sm:$0xff] %v790
        %802 = vst [vmem:[#allocation4 + $0x28] sm:$0xff] %v792
        %803 = vst [vmem:[#allocation4 + $0x30] sm:$0xff] %v794
        %804 = vst [vmem:[#allocation4 + $0x38] sm:$0xff] %v796
        %v805 = vperm.slane %v708, 0
        %v806 = vlaneseq
        %v807 = vshrl.u32 %v806, 7
        %v808 = vadd.s32 %v807, 64
        %809 = vset.pattern.permute.xlu0 %v808
        %810 = vperm.xlu0 %809, %v805
        %v811 = vpop.permute.xlu0 %810
        %v812 = vperm.slane %v708, 1
        %v813 = vlaneseq
        %v814 = vshrl.u32 %v813, 7
        %v815 = vadd.s32 %v814, 64
        %816 = vset.pattern.permute.xlu0 %v815
        %817 = vperm.xlu0 %816, %v812
        %v818 = vpop.permute.xlu0 %817
        %v819 = vperm.slane %v708, 2
        %v820 = vlaneseq
        %v821 = vshrl.u32 %v820, 7
        %v822 = vadd.s32 %v821, 64
        %823 = vset.pattern.permute.xlu0 %v822
        %824 = vperm.xlu0 %823, %v819
        %v825 = vpop.permute.xlu0 %824
        %v826 = vperm.slane %v708, 3
        %v827 = vlaneseq
        %v828 = vshrl.u32 %v827, 7
        %v829 = vadd.s32 %v828, 64
        %830 = vset.pattern.permute.xlu0 %v829
        %831 = vperm.xlu0 %830, %v826
        %v832 = vpop.permute.xlu0 %831
        %v833 = vperm.slane %v708, 4
        %v834 = vlaneseq
        %v835 = vshrl.u32 %v834, 7
        %v836 = vadd.s32 %v835, 64
        %837 = vset.pattern.permute.xlu0 %v836
        %838 = vperm.xlu0 %837, %v833
        %v839 = vpop.permute.xlu0 %838
        %v840 = vperm.slane %v708, 5
        %v841 = vlaneseq
        %v842 = vshrl.u32 %v841, 7
        %v843 = vadd.s32 %v842, 64
        %844 = vset.pattern.permute.xlu0 %v843
        %845 = vperm.xlu0 %844, %v840
        %v846 = vpop.permute.xlu0 %845
        %v847 = vperm.slane %v708, 6
        %v848 = vlaneseq
        %v849 = vshrl.u32 %v848, 7
        %v850 = vadd.s32 %v849, 64
        %851 = vset.pattern.permute.xlu0 %v850
        %852 = vperm.xlu0 %851, %v847
        %v853 = vpop.permute.xlu0 %852
        %v854 = vperm.slane %v708, 7
        %v855 = vlaneseq
        %v856 = vshrl.u32 %v855, 7
        %v857 = vadd.s32 %v856, 64
        %858 = vset.pattern.permute.xlu0 %v857
        %859 = vperm.xlu0 %858, %v854
        %v860 = vpop.permute.xlu0 %859
        %v862 = vrot.slane %v734, 1
        %v863 = vrot.slane %v734, 2
        %v864 = vrot.slane %v734, 3
        %v865 = vrot.slane %v734, 4
        %v866 = vrot.slane %v734, 5
        %v867 = vrot.slane %v734, 6
        %v868 = vrot.slane %v734, 7
        %v869 = vperm.slane %v734, 0
        %v870 = vperm.slane %v862, 0
        %v871 = vperm.slane %v863, 0
        %v872 = vperm.slane %v864, 0
        %v873 = vperm.slane %v865, 0
        %v874 = vperm.slane %v866, 0
        %v875 = vperm.slane %v867, 0
        %v876 = vperm.slane %v868, 0
        %v885 = vmul.f32 %v811, %v869
        %v886 = vmul.f32 %v818, %v870
        %v887 = vmul.f32 %v825, %v871
        %v888 = vmul.f32 %v832, %v872
        %v889 = vmul.f32 %v839, %v873
        %v890 = vmul.f32 %v846, %v874
        %v891 = vmul.f32 %v853, %v875
        %v892 = vmul.f32 %v860, %v876
        %v893 = vlaneseq
        %v894 = vshrl.u32 %v893, 7
        %v895 = vadd.s32 %v894, 72
        %896 = vset.pattern.permute.xlu0 %v895
        %897 = vperm.xlu0 %896, %v805
        %v898 = vpop.permute.xlu0 %897
        %v899 = vlaneseq
        %v900 = vshrl.u32 %v899, 7
        %v901 = vadd.s32 %v900, 72
        %902 = vset.pattern.permute.xlu0 %v901
        %903 = vperm.xlu0 %902, %v812
        %v904 = vpop.permute.xlu0 %903
        %v905 = vlaneseq
        %v906 = vshrl.u32 %v905, 7
        %v907 = vadd.s32 %v906, 72
        %908 = vset.pattern.permute.xlu0 %v907
        %909 = vperm.xlu0 %908, %v819
        %v910 = vpop.permute.xlu0 %909
        %v911 = vlaneseq
        %v912 = vshrl.u32 %v911, 7
        %v913 = vadd.s32 %v912, 72
        %914 = vset.pattern.permute.xlu0 %v913
        %915 = vperm.xlu0 %914, %v826
        %v916 = vpop.permute.xlu0 %915
        %v917 = vlaneseq
        %v918 = vshrl.u32 %v917, 7
        %v919 = vadd.s32 %v918, 72
        %920 = vset.pattern.permute.xlu0 %v919
        %921 = vperm.xlu0 %920, %v833
        %v922 = vpop.permute.xlu0 %921
        %v923 = vlaneseq
        %v924 = vshrl.u32 %v923, 7
        %v925 = vadd.s32 %v924, 72
        %926 = vset.pattern.permute.xlu0 %v925
        %927 = vperm.xlu0 %926, %v840
        %v928 = vpop.permute.xlu0 %927
        %v929 = vlaneseq
        %v930 = vshrl.u32 %v929, 7
        %v931 = vadd.s32 %v930, 72
        %932 = vset.pattern.permute.xlu0 %v931
        %933 = vperm.xlu0 %932, %v847
        %v934 = vpop.permute.xlu0 %933
        %v935 = vlaneseq
        %v936 = vshrl.u32 %v935, 7
        %v937 = vadd.s32 %v936, 72
        %938 = vset.pattern.permute.xlu0 %v937
        %939 = vperm.xlu0 %938, %v854
        %v940 = vpop.permute.xlu0 %939
        %v941 = vmul.f32 %v898, %v869
        %v942 = vmul.f32 %v904, %v870
        %v943 = vmul.f32 %v910, %v871
        %v944 = vmul.f32 %v916, %v872
        %v945 = vmul.f32 %v922, %v873
        %v946 = vmul.f32 %v928, %v874
        %v947 = vmul.f32 %v934, %v875
        %v948 = vmul.f32 %v940, %v876
        %957 = vrot.lane.b32.xlu0 %v941, 64
        %v958 = vpop.permute.xlu0 %957
        %959 = vrot.lane.b32.xlu0 %v942, 64
        %v960 = vpop.permute.xlu0 %959
        %961 = vrot.lane.b32.xlu0 %v943, 64
        %v962 = vpop.permute.xlu0 %961
        %963 = vrot.lane.b32.xlu0 %v944, 64
        %v964 = vpop.permute.xlu0 %963
        %965 = vrot.lane.b32.xlu0 %v945, 64
        %v966 = vpop.permute.xlu0 %965
        %967 = vrot.lane.b32.xlu0 %v946, 64
        %v968 = vpop.permute.xlu0 %967
        %969 = vrot.lane.b32.xlu0 %v947, 64
        %v970 = vpop.permute.xlu0 %969
        %971 = vrot.lane.b32.xlu0 %v948, 64
        %v972 = vpop.permute.xlu0 %971
        %v981 = vsel %vm694, %v885, %v958
        %v982 = vsel %vm694, %v886, %v960
        %v983 = vsel %vm694, %v887, %v962
        %v984 = vsel %vm694, %v888, %v964
        %v985 = vsel %vm694, %v889, %v966
        %v986 = vsel %vm694, %v890, %v968
        %v987 = vsel %vm694, %v891, %v970
        %v988 = vsel %vm694, %v892, %v972
        %989 = vst [vmem:[#allocation5] sm:$0xff] %v981
        %990 = vst [vmem:[#allocation5 + $0x8] sm:$0xff] %v982
        %991 = vst [vmem:[#allocation5 + $0x10] sm:$0xff] %v983
        %992 = vst [vmem:[#allocation5 + $0x18] sm:$0xff] %v984
        %993 = vst [vmem:[#allocation5 + $0x20] sm:$0xff] %v985
        %994 = vst [vmem:[#allocation5 + $0x28] sm:$0xff] %v986
        %995 = vst [vmem:[#allocation5 + $0x30] sm:$0xff] %v987
        %996 = vst [vmem:[#allocation5 + $0x38] sm:$0xff] %v988
        %v997 = vld [vmem:[#allocation2] sm:$0xff]
        %v998 = vld [vmem:[#allocation4] sm:$0xff]
        %v999 = vmul.f32 %v998, %v997
        %v1000 = vld [vmem:[#allocation5] sm:$0xff]
        %v1001 = vadd.f32 %v999, %v1000
        %1002 = vst [vmem:[#allocation6] sm:$0xff] %v1001
        %s1003 = scalar_lea.vmem [#allocation4], 8
        %v1004 = vld [vmem:[%s1003] sm:$0xff]
        %v1005 = vmul.f32 %v1004, %v1001
        %s1006 = scalar_lea.vmem [#allocation5], 8
        %v1007 = vld [vmem:[%s1006] sm:$0xff]
        %v1008 = vadd.f32 %v1005, %v1007
        %s1009 = scalar_lea.vmem [#allocation6], 8
        %1010 = vst [vmem:[%s1009] sm:$0xff] %v1008
        %s1011 = scalar_lea.vmem [#allocation4], 16
        %v1012 = vld [vmem:[%s1011] sm:$0xff]
        %v1013 = vmul.f32 %v1012, %v1008
        %s1014 = scalar_lea.vmem [#allocation5], 16
        %v1015 = vld [vmem:[%s1014] sm:$0xff]
        %v1016 = vadd.f32 %v1013, %v1015
        %s1017 = scalar_lea.vmem [#allocation6], 16
        %1018 = vst [vmem:[%s1017] sm:$0xff] %v1016
        %s1019 = scalar_lea.vmem [#allocation4], 24
        %v1020 = vld [vmem:[%s1019] sm:$0xff]
        %v1021 = vmul.f32 %v1020, %v1016
        %s1022 = scalar_lea.vmem [#allocation5], 24
        %v1023 = vld [vmem:[%s1022] sm:$0xff]
        %v1024 = vadd.f32 %v1021, %v1023
        %s1025 = scalar_lea.vmem [#allocation6], 24
        %1026 = vst [vmem:[%s1025] sm:$0xff] %v1024
        %s1027 = scalar_lea.vmem [#allocation4], 32
        %v1028 = vld [vmem:[%s1027] sm:$0xff]
        %v1029 = vmul.f32 %v1028, %v1024
        %s1030 = scalar_lea.vmem [#allocation5], 32
        %v1031 = vld [vmem:[%s1030] sm:$0xff]
        %v1032 = vadd.f32 %v1029, %v1031
        %s1033 = scalar_lea.vmem [#allocation6], 32
        %1034 = vst [vmem:[%s1033] sm:$0xff] %v1032
        %s1035 = scalar_lea.vmem [#allocation4], 40
        %v1036 = vld [vmem:[%s1035] sm:$0xff]
        %v1037 = vmul.f32 %v1036, %v1032
        %s1038 = scalar_lea.vmem [#allocation5], 40
        %v1039 = vld [vmem:[%s1038] sm:$0xff]
        %v1040 = vadd.f32 %v1037, %v1039
        %s1041 = scalar_lea.vmem [#allocation6], 40
        %1042 = vst [vmem:[%s1041] sm:$0xff] %v1040
        %s1043 = scalar_lea.vmem [#allocation4], 48
        %v1044 = vld [vmem:[%s1043] sm:$0xff]
        %v1045 = vmul.f32 %v1044, %v1040
        %s1046 = scalar_lea.vmem [#allocation5], 48
        %v1047 = vld [vmem:[%s1046] sm:$0xff]
        %v1048 = vadd.f32 %v1045, %v1047
        %s1049 = scalar_lea.vmem [#allocation6], 48
        %1050 = vst [vmem:[%s1049] sm:$0xff] %v1048
        %s1051 = scalar_lea.vmem [#allocation4], 56
        %v1052 = vld [vmem:[%s1051] sm:$0xff]
        %v1053 = vmul.f32 %v1052, %v1048
        %s1054 = scalar_lea.vmem [#allocation5], 56
        %v1055 = vld [vmem:[%s1054] sm:$0xff]
        %v1056 = vadd.f32 %v1053, %v1055
        %s1057 = scalar_lea.vmem [#allocation6], 56
        %1058 = vst [vmem:[%s1057] sm:$0xff] %v1056
        %1059 = vst [vmem:[#allocation2] sm:$0xff] %v1056
        %v1060 = vld [vmem:[#allocation6] sm:$0xff]
        %v1061 = vld [vmem:[#allocation6 + $0x8] sm:$0xff]
        %v1062 = vld [vmem:[#allocation6 + $0x10] sm:$0xff]
        %v1063 = vld [vmem:[#allocation6 + $0x18] sm:$0xff]
        %v1064 = vld [vmem:[#allocation6 + $0x20] sm:$0xff]
        %v1065 = vld [vmem:[#allocation6 + $0x28] sm:$0xff]
        %v1066 = vld [vmem:[#allocation6 + $0x30] sm:$0xff]
        %v1067 = vld [vmem:[#allocation6 + $0x38] sm:$0xff]
        %v1068 = vlaneseq
        %v1069 = vshrl.u32 %v1068, 7
        %v1070 = vadd.s32 %v1069, 80
        %1071 = vset.pattern.permute.xlu0 %v1070
        %1072 = vperm.xlu0 %1071, %v805
        %v1073 = vpop.permute.xlu0 %1072
        %v1074 = vlaneseq
        %v1075 = vshrl.u32 %v1074, 7
        %v1076 = vadd.s32 %v1075, 80
        %1077 = vset.pattern.permute.xlu0 %v1076
        %1078 = vperm.xlu0 %1077, %v812
        %v1079 = vpop.permute.xlu0 %1078
        %v1080 = vlaneseq
        %v1081 = vshrl.u32 %v1080, 7
        %v1082 = vadd.s32 %v1081, 80
        %1083 = vset.pattern.permute.xlu0 %v1082
        %1084 = vperm.xlu0 %1083, %v819
        %v1085 = vpop.permute.xlu0 %1084
        %v1086 = vlaneseq
        %v1087 = vshrl.u32 %v1086, 7
        %v1088 = vadd.s32 %v1087, 80
        %1089 = vset.pattern.permute.xlu0 %v1088
        %1090 = vperm.xlu0 %1089, %v826
        %v1091 = vpop.permute.xlu0 %1090
        %v1092 = vlaneseq
        %v1093 = vshrl.u32 %v1092, 7
        %v1094 = vadd.s32 %v1093, 80
        %1095 = vset.pattern.permute.xlu0 %v1094
        %1096 = vperm.xlu0 %1095, %v833
        %v1097 = vpop.permute.xlu0 %1096
        %v1098 = vlaneseq
        %v1099 = vshrl.u32 %v1098, 7
        %v1100 = vadd.s32 %v1099, 80
        %1101 = vset.pattern.permute.xlu0 %v1100
        %1102 = vperm.xlu0 %1101, %v840
        %v1103 = vpop.permute.xlu0 %1102
        %v1104 = vlaneseq
        %v1105 = vshrl.u32 %v1104, 7
        %v1106 = vadd.s32 %v1105, 80
        %1107 = vset.pattern.permute.xlu0 %v1106
        %1108 = vperm.xlu0 %1107, %v847
        %v1109 = vpop.permute.xlu0 %1108
        %v1110 = vlaneseq
        %v1111 = vshrl.u32 %v1110, 7
        %v1112 = vadd.s32 %v1111, 80
        %1113 = vset.pattern.permute.xlu0 %v1112
        %1114 = vperm.xlu0 %1113, %v854
        %v1115 = vpop.permute.xlu0 %1114
        %v1116 = vmul.f32 %v1060, %v1073
        %v1117 = vmul.f32 %v1061, %v1079
        %v1118 = vmul.f32 %v1062, %v1085
        %v1119 = vmul.f32 %v1063, %v1091
        %v1120 = vmul.f32 %v1064, %v1097
        %v1121 = vmul.f32 %v1065, %v1103
        %v1122 = vmul.f32 %v1066, %v1109
        %v1123 = vmul.f32 %v1067, %v1115
        %v1124 = vsel %vm694, %v1116, 0.0
        %v1125 = vrot.slane %v1124, 4
        %v1126 = vadd.f32 %v1124, %v1125
        %v1127 = vrot.slane %v1126, 2
        %v1128 = vadd.f32 %v1126, %v1127
        %v1129 = vrot.slane %v1128, 1
        %v1130 = vadd.f32 %v1128, %v1129
        %v1131 = vsel %vm694, %v1117, 0.0
        %v1132 = vrot.slane %v1131, 4
        %v1133 = vadd.f32 %v1131, %v1132
        %v1134 = vrot.slane %v1133, 2
        %v1135 = vadd.f32 %v1133, %v1134
        %v1136 = vrot.slane %v1135, 1
        %v1137 = vadd.f32 %v1135, %v1136
        %v1138 = vsel %vm694, %v1118, 0.0
        %v1139 = vrot.slane %v1138, 4
        %v1140 = vadd.f32 %v1138, %v1139
        %v1141 = vrot.slane %v1140, 2
        %v1142 = vadd.f32 %v1140, %v1141
        %v1143 = vrot.slane %v1142, 1
        %v1144 = vadd.f32 %v1142, %v1143
        %v1145 = vsel %vm694, %v1119, 0.0
        %v1146 = vrot.slane %v1145, 4
        %v1147 = vadd.f32 %v1145, %v1146
        %v1148 = vrot.slane %v1147, 2
        %v1149 = vadd.f32 %v1147, %v1148
        %v1150 = vrot.slane %v1149, 1
        %v1151 = vadd.f32 %v1149, %v1150
        %v1152 = vsel %vm694, %v1120, 0.0
        %v1153 = vrot.slane %v1152, 4
        %v1154 = vadd.f32 %v1152, %v1153
        %v1155 = vrot.slane %v1154, 2
        %v1156 = vadd.f32 %v1154, %v1155
        %v1157 = vrot.slane %v1156, 1
        %v1158 = vadd.f32 %v1156, %v1157
        %v1159 = vsel %vm694, %v1121, 0.0
        %v1160 = vrot.slane %v1159, 4
        %v1161 = vadd.f32 %v1159, %v1160
        %v1162 = vrot.slane %v1161, 2
        %v1163 = vadd.f32 %v1161, %v1162
        %v1164 = vrot.slane %v1163, 1
        %v1165 = vadd.f32 %v1163, %v1164
        %v1166 = vsel %vm694, %v1122, 0.0
        %v1167 = vrot.slane %v1166, 4
        %v1168 = vadd.f32 %v1166, %v1167
        %v1169 = vrot.slane %v1168, 2
        %v1170 = vadd.f32 %v1168, %v1169
        %v1171 = vrot.slane %v1170, 1
        %v1172 = vadd.f32 %v1170, %v1171
        %v1173 = vsel %vm694, %v1123, 0.0
        %v1174 = vrot.slane %v1173, 4
        %v1175 = vadd.f32 %v1173, %v1174
        %v1176 = vrot.slane %v1175, 2
        %v1177 = vadd.f32 %v1175, %v1176
        %v1178 = vrot.slane %v1177, 1
        %v1179 = vadd.f32 %v1177, %v1178
        %v1180 = vadd.f32 %v1130, 0.0
        %v1181 = vadd.f32 %v1137, 0.0
        %v1182 = vadd.f32 %v1144, 0.0
        %v1183 = vadd.f32 %v1151, 0.0
        %v1184 = vadd.f32 %v1158, 0.0
        %v1185 = vadd.f32 %v1165, 0.0
        %v1186 = vadd.f32 %v1172, 0.0
        %v1187 = vadd.f32 %v1179, 0.0
        %v1188 = vlaneseq
        %v1189 = vshrl.u32 %v1188, 7
        %v1190 = vadd.s32 %v1189, 88
        %1191 = vset.pattern.permute.xlu0 %v1190
        %1192 = vperm.xlu0 %1191, %v805
        %v1193 = vpop.permute.xlu0 %1192
        %v1194 = vlaneseq
        %v1195 = vshrl.u32 %v1194, 7
        %v1196 = vadd.s32 %v1195, 88
        %1197 = vset.pattern.permute.xlu0 %v1196
        %1198 = vperm.xlu0 %1197, %v812
        %v1199 = vpop.permute.xlu0 %1198
        %v1200 = vlaneseq
        %v1201 = vshrl.u32 %v1200, 7
        %v1202 = vadd.s32 %v1201, 88
        %1203 = vset.pattern.permute.xlu0 %v1202
        %1204 = vperm.xlu0 %1203, %v819
        %v1205 = vpop.permute.xlu0 %1204
        %v1206 = vlaneseq
        %v1207 = vshrl.u32 %v1206, 7
        %v1208 = vadd.s32 %v1207, 88
        %1209 = vset.pattern.permute.xlu0 %v1208
        %1210 = vperm.xlu0 %1209, %v826
        %v1211 = vpop.permute.xlu0 %1210
        %v1212 = vlaneseq
        %v1213 = vshrl.u32 %v1212, 7
        %v1214 = vadd.s32 %v1213, 88
        %1215 = vset.pattern.permute.xlu0 %v1214
        %1216 = vperm.xlu0 %1215, %v833
        %v1217 = vpop.permute.xlu0 %1216
        %v1218 = vlaneseq
        %v1219 = vshrl.u32 %v1218, 7
        %v1220 = vadd.s32 %v1219, 88
        %1221 = vset.pattern.permute.xlu0 %v1220
        %1222 = vperm.xlu0 %1221, %v840
        %v1223 = vpop.permute.xlu0 %1222
        %v1224 = vlaneseq
        %v1225 = vshrl.u32 %v1224, 7
        %v1226 = vadd.s32 %v1225, 88
        %1227 = vset.pattern.permute.xlu0 %v1226
        %1228 = vperm.xlu0 %1227, %v847
        %v1229 = vpop.permute.xlu0 %1228
        %v1230 = vlaneseq
        %v1231 = vshrl.u32 %v1230, 7
        %v1232 = vadd.s32 %v1231, 88
        %1233 = vset.pattern.permute.xlu0 %v1232
        %1234 = vperm.xlu0 %1233, %v854
        %v1235 = vpop.permute.xlu0 %1234
        %v1236 = vmul.f32 %v1060, %v1193
        %v1237 = vmul.f32 %v1061, %v1199
        %v1238 = vmul.f32 %v1062, %v1205
        %v1239 = vmul.f32 %v1063, %v1211
        %v1240 = vmul.f32 %v1064, %v1217
        %v1241 = vmul.f32 %v1065, %v1223
        %v1242 = vmul.f32 %v1066, %v1229
        %v1243 = vmul.f32 %v1067, %v1235
        %vm1244 = vcmask 1048064
        %v1245 = vsel %vm1244, %v1236, 0.0
        %v1246 = vrot.slane %v1245, 4
        %v1247 = vadd.f32 %v1245, %v1246
        %v1248 = vrot.slane %v1247, 2
        %v1249 = vadd.f32 %v1247, %v1248
        %v1250 = vrot.slane %v1249, 1
        %v1251 = vadd.f32 %v1249, %v1250
        %v1252 = vsel %vm1244, %v1237, 0.0
        %v1253 = vrot.slane %v1252, 4
        %v1254 = vadd.f32 %v1252, %v1253
        %v1255 = vrot.slane %v1254, 2
        %v1256 = vadd.f32 %v1254, %v1255
        %v1257 = vrot.slane %v1256, 1
        %v1258 = vadd.f32 %v1256, %v1257
        %v1259 = vsel %vm1244, %v1238, 0.0
        %v1260 = vrot.slane %v1259, 4
        %v1261 = vadd.f32 %v1259, %v1260
        %v1262 = vrot.slane %v1261, 2
        %v1263 = vadd.f32 %v1261, %v1262
        %v1264 = vrot.slane %v1263, 1
        %v1265 = vadd.f32 %v1263, %v1264
        %v1266 = vsel %vm1244, %v1239, 0.0
        %v1267 = vrot.slane %v1266, 4
        %v1268 = vadd.f32 %v1266, %v1267
        %v1269 = vrot.slane %v1268, 2
        %v1270 = vadd.f32 %v1268, %v1269
        %v1271 = vrot.slane %v1270, 1
        %v1272 = vadd.f32 %v1270, %v1271
        %v1273 = vsel %vm1244, %v1240, 0.0
        %v1274 = vrot.slane %v1273, 4
        %v1275 = vadd.f32 %v1273, %v1274
        %v1276 = vrot.slane %v1275, 2
        %v1277 = vadd.f32 %v1275, %v1276
        %v1278 = vrot.slane %v1277, 1
        %v1279 = vadd.f32 %v1277, %v1278
        %v1280 = vsel %vm1244, %v1241, 0.0
        %v1281 = vrot.slane %v1280, 4
        %v1282 = vadd.f32 %v1280, %v1281
        %v1283 = vrot.slane %v1282, 2
        %v1284 = vadd.f32 %v1282, %v1283
        %v1285 = vrot.slane %v1284, 1
        %v1286 = vadd.f32 %v1284, %v1285
        %v1287 = vsel %vm1244, %v1242, 0.0
        %v1288 = vrot.slane %v1287, 4
        %v1289 = vadd.f32 %v1287, %v1288
        %v1290 = vrot.slane %v1289, 2
        %v1291 = vadd.f32 %v1289, %v1290
        %v1292 = vrot.slane %v1291, 1
        %v1293 = vadd.f32 %v1291, %v1292
        %v1294 = vsel %vm1244, %v1243, 0.0
        %v1295 = vrot.slane %v1294, 4
        %v1296 = vadd.f32 %v1294, %v1295
        %v1297 = vrot.slane %v1296, 2
        %v1298 = vadd.f32 %v1296, %v1297
        %v1299 = vrot.slane %v1298, 1
        %v1300 = vadd.f32 %v1298, %v1299
        %1309 = vrot.lane.b32.xlu0 %v1251, 64
        %v1310 = vpop.permute.xlu0 %1309
        %1311 = vrot.lane.b32.xlu0 %v1258, 64
        %v1312 = vpop.permute.xlu0 %1311
        %1313 = vrot.lane.b32.xlu0 %v1265, 64
        %v1314 = vpop.permute.xlu0 %1313
        %1315 = vrot.lane.b32.xlu0 %v1272, 64
        %v1316 = vpop.permute.xlu0 %1315
        %1317 = vrot.lane.b32.xlu0 %v1279, 64
        %v1318 = vpop.permute.xlu0 %1317
        %1319 = vrot.lane.b32.xlu0 %v1286, 64
        %v1320 = vpop.permute.xlu0 %1319
        %1321 = vrot.lane.b32.xlu0 %v1293, 64
        %v1322 = vpop.permute.xlu0 %1321
        %1323 = vrot.lane.b32.xlu0 %v1300, 64
        %v1324 = vpop.permute.xlu0 %1323
        %v1333 = vadd.f32 %v1180, %v1310
        %v1334 = vadd.f32 %v1181, %v1312
        %v1335 = vadd.f32 %v1182, %v1314
        %v1336 = vadd.f32 %v1183, %v1316
        %v1337 = vadd.f32 %v1184, %v1318
        %v1338 = vadd.f32 %v1185, %v1320
        %v1339 = vadd.f32 %v1186, %v1322
        %v1340 = vadd.f32 %v1187, %v1324
        %v1341 = vld [vmem:[%s8] sm:$0x1]
        %v1343 = vperm.slane %v1341, 0
        %v1345 = vmul.f32 %v660, %v1343
        %v1347 = vrot.slane %v1345, 1
        %v1348 = vrot.slane %v1345, 2
        %v1349 = vrot.slane %v1345, 3
        %v1350 = vrot.slane %v1345, 4
        %v1351 = vrot.slane %v1345, 5
        %v1352 = vrot.slane %v1345, 6
        %v1353 = vrot.slane %v1345, 7
        %v1362 = vadd.f32 %v1333, %v1345
        %v1363 = vadd.f32 %v1334, %v1347
        %v1364 = vadd.f32 %v1335, %v1348
        %v1365 = vadd.f32 %v1336, %v1349
        %v1366 = vadd.f32 %v1337, %v1350
        %v1367 = vadd.f32 %v1338, %v1351
        %v1368 = vadd.f32 %v1339, %v1352
        %v1369 = vadd.f32 %v1340, %v1353
        %v1370 = vxor.u32 %v588, 2147483648
        %v1371 = vmul.f32 %v1370, 1.442695
        %v1372 = vpow.pop %v1371
        %v1373 = vadd.f32 %v1372, 1.0
        %v1374 = vrcp.pop %v1373
        %v1375 = vmul.f32 %v1373, %v1374
        %v1376 = vsub.f32 1.0, %v1375
        %v1377 = vmul.f32 %v1374, %v1376
        %v1378 = vadd.f32 %v1374, %v1377
        %vm1379 = vweird.f32 %v1373
        %vm1380 = vweird.f32 %v1374
        %vm1381 = vmor %vm1379, %vm1380
        %v1382 = vsel %vm1381, %v1374, %v1378
        %v1383 = vand.u32 2147483647, %v1373
        %vm1384 = vcmp.eq.f32.partialorder %v1383, 8.507059e+37
        %v1385 = vand.u32 %v1373, 2147483648
        %v1386 = vor.u32 1.1754944e-38, %v1385
        %v1387 = vsel %vm1384, %v1386, %v1382
        %v1388 = vmul.f32 1.0, %v1387
        %v1389 = vmul.f32 %v588, %v1388
        %v1391 = vrot.slane %v1389, 1
        %v1392 = vrot.slane %v1389, 2
        %v1393 = vrot.slane %v1389, 3
        %v1394 = vrot.slane %v1389, 4
        %v1395 = vrot.slane %v1389, 5
        %v1396 = vrot.slane %v1389, 6
        %v1397 = vrot.slane %v1389, 7
        %1398 = vrot.lane.b32.xlu0 %v1389, 64
        %v1399 = vpop.permute.xlu0 %1398
        %1400 = vrot.lane.b32.xlu0 %v1391, 64
        %v1401 = vpop.permute.xlu0 %1400
        %1402 = vrot.lane.b32.xlu0 %v1392, 64
        %v1403 = vpop.permute.xlu0 %1402
        %1404 = vrot.lane.b32.xlu0 %v1393, 64
        %v1405 = vpop.permute.xlu0 %1404
        %1406 = vrot.lane.b32.xlu0 %v1394, 64
        %v1407 = vpop.permute.xlu0 %1406
        %1408 = vrot.lane.b32.xlu0 %v1395, 64
        %v1409 = vpop.permute.xlu0 %1408
        %1410 = vrot.lane.b32.xlu0 %v1396, 64
        %v1411 = vpop.permute.xlu0 %1410
        %1412 = vrot.lane.b32.xlu0 %v1397, 64
        %v1413 = vpop.permute.xlu0 %1412
        %v1422 = vmul.f32 %v1362, %v1399
        %v1423 = vmul.f32 %v1363, %v1401
        %v1424 = vmul.f32 %v1364, %v1403
        %v1425 = vmul.f32 %v1365, %v1405
        %v1426 = vmul.f32 %v1366, %v1407
        %v1427 = vmul.f32 %v1367, %v1409
        %v1428 = vmul.f32 %v1368, %v1411
        %v1429 = vmul.f32 %v1369, %v1413
        %v1430 = vpack.c.bf16 %v1422, %v1422
        %v1431 = vpack.c.bf16 %v1423, %v1423
        %v1432 = vpack.c.bf16 %v1424, %v1424
        %v1433 = vpack.c.bf16 %v1425, %v1425
        %v1434 = vpack.c.bf16 %v1426, %v1426
        %v1435 = vpack.c.bf16 %v1427, %v1427
        %v1436 = vpack.c.bf16 %v1428, %v1428
        %v1437 = vpack.c.bf16 %v1429, %v1429
        %v1438 = vld [vmem:[%s10] sm:$0xf]
        %v1439 = vld [vmem:[%s10 + $0x4] sm:$0xf]
        %v1440 = vld [vmem:[%s10 + $0x8] sm:$0xf]
        %v1441 = vld [vmem:[%s10 + $0xc] sm:$0xf]
        %v1442 = vld [vmem:[%s10 + $0x10] sm:$0xf]
        %v1443 = vld [vmem:[%s10 + $0x14] sm:$0xf]
        %v1444 = vld [vmem:[%s10 + $0x18] sm:$0xf]
        %v1445 = vld [vmem:[%s10 + $0x1c] sm:$0xf]
        %v1454 = vunpack.c.l.b16 %v1430
        %v1455 = vunpack.c.l.b16 %v1431
        %v1456 = vunpack.c.l.b16 %v1432
        %v1457 = vunpack.c.l.b16 %v1433
        %v1458 = vunpack.c.l.b16 %v1434
        %v1459 = vunpack.c.l.b16 %v1435
        %v1460 = vunpack.c.l.b16 %v1436
        %v1461 = vunpack.c.l.b16 %v1437
        %v1462 = vrot.slane %v1455, 7
        %vm1463 = vcmask 1041409
        %v1464 = vsel %vm1463, %v1462, %v1454
        %v1465 = vrot.slane %v1456, 6
        %vm1466 = vcmask 1042434
        %v1467 = vsel %vm1466, %v1465, %v1464
        %v1468 = vrot.slane %v1457, 5
        %vm1469 = vcmask 1043459
        %v1470 = vsel %vm1469, %v1468, %v1467
        %v1471 = vrot.slane %v1458, 4
        %vm1472 = vcmask 1044484
        %v1473 = vsel %vm1472, %v1471, %v1470
        %v1474 = vrot.slane %v1459, 3
        %vm1475 = vcmask 1045509
        %v1476 = vsel %vm1475, %v1474, %v1473
        %v1477 = vrot.slane %v1460, 2
        %vm1478 = vcmask 1046534
        %v1479 = vsel %vm1478, %v1477, %v1476
        %v1480 = vrot.slane %v1461, 1
        %vm1481 = vcmask 1047559
        %v1482 = vsel %vm1481, %v1480, %v1479
        %v1483 = vpack.c.b16 %v1482, %v1482
        %v1492 = vunpack.c.l.b16 %v1438
        %v1493 = vunpack.c.l.b16 %v1439
        %v1494 = vunpack.c.l.b16 %v1440
        %v1495 = vunpack.c.l.b16 %v1441
        %v1496 = vunpack.c.l.b16 %v1442
        %v1497 = vunpack.c.l.b16 %v1443
        %v1498 = vunpack.c.l.b16 %v1444
        %v1499 = vunpack.c.l.b16 %v1445
        %v1500 = vpack.c.b16 %v1493, %v1492
        %v1501 = vpack.c.b16 %v1495, %v1494
        %v1502 = vpack.c.b16 %v1497, %v1496
        %v1503 = vpack.c.b16 %v1499, %v1498
        %v1509 = vsel %vm694, %v1483, 0
        %1511 = vmatpush.bf16.msra.mxu0 0
        %1512 = vmatpush.bf16.msra.mxu0 0
        %1513 = vmatpush.bf16.msra.mxu0 0
        %1514 = vmatpush.bf16.msra.mxu0 0
        %1515 = vmatpush.bf16.msra.mxu0 %v1503
        %1516 = vmatpush.bf16.msra.mxu0 %v1502
        %1517 = vmatpush.bf16.msra.mxu0 %v1501
        %1518 = vmatpush.bf16.msra.mxu0 %v1500
        %1519 = vmatmul.bf16.gmra.mxu0 %v1509
        %v1520 = vpop.f32.mrf.mxu0
        %v1521 = vadd.f32 0.0, %v1520
        %v1522 = vpop.f32.mrf.mxu0
        %1523 = vdwg.mxu0
        %1524 = vst.msk [vmem:[%s493] sm:$0xff] %vm517, %v1521
        %s1525 = sand.u32 %s293, 1
        %s1526 = scalar_lea.sflag [#allocation9], %s1525
        %s1527 = sand.u32 %s293, 1
        %s1528 = smul.addr %s1527, 8
        %s1529 = scalar_lea.vmem [#allocation15], %s1528
        %s1530 = sand.u32 %s321, 1
        %s1531 = scalar_lea.sflag [#allocation17], %s1530
        %s1532 = sand.u32 %s321, 1
        %s1533 = smul.addr %s1532, 8
        %s1534 = scalar_lea.vmem [#allocation16], %s1533
        // Predicated region
        $region85: #{tpu_custom_call.1} parent=63 // pred_check
          %p1535 = pneg %p303
        $region86: #{tpu_custom_call.1} parent=63 // pred_check_branch
          %1537 = sbr.rel (%p1535) target = $region88
        $region87: #{tpu_custom_call.1} parent=63 // pred_region
          %1539 = vsyncadd %s1526, 0
          %s1540 = sadd.s32 %s38, %s37
          %s1541 = smul.addr %s1540, 8
          %s1542 = scalar_lea.hbm %s11, %s1541
          %s1544 = sshll.u32 %s1529, 4
          %s1545 = int_to_ptr.vmem [resolvable:$true] %s1544
          %s1546 = sshll.u32 %s1542, 4
          %s1547 = int_to_ptr.hbm [resolvable:$true] %s1546
          %1549 = dma.vmem_to_hbm [thread:$0]  %s1545, 128, %s1547, %s1526
        $region88: #{tpu_custom_call.1} parent=63 // pred_fallthru
          _
        // Predicated region
        $region89: #{tpu_custom_call.1} parent=63 // pred_check
          %p1550 = pneg %p331
        $region90: #{tpu_custom_call.1} parent=63 // pred_check_branch
          %1552 = sbr.rel (%p1550) target = $region92
        $region91: #{tpu_custom_call.1} parent=63 // pred_region
          %1554 = vsyncadd %s1531, 0
          %s1555 = sadd.s32 %s38, %s37
          %s1556 = smul.addr %s1555, 8
          %s1557 = scalar_lea.hbm %s12, %s1556
          %s1559 = sshll.u32 %s1534, 4
          %s1560 = int_to_ptr.vmem [resolvable:$true] %s1559
          %s1561 = sshll.u32 %s1557, 4
          %s1562 = int_to_ptr.hbm [resolvable:$true] %s1561
          %1564 = dma.vmem_to_hbm [thread:$0]  %s1560, 128, %s1562, %s1531
        $region92: #{tpu_custom_call.1} parent=63 // pred_fallthru
          _
      $region64: #{tpu_custom_call.1} parent=5 // pred_fallthru
        _
      %p1565 = scmp.le.s32.totalorder 2, %s28
      // Predicated region
      $region93: #{tpu_custom_call.1} parent=5 // pred_check
        %p1566 = pneg %p1565
      $region94: #{tpu_custom_call.1} parent=5 // pred_check_branch
        %1568 = sbr.rel (%p1566) target = $region96
      $region95: #{tpu_custom_call.1} parent=5 // pred_region
        %s1569 = ssub.s32 %s28, 2
        // Predicated region
        $region97: #{tpu_custom_call.1} parent=95 // pred_check
          %p1570 = pneg %p309
        $region98: #{tpu_custom_call.1} parent=95 // pred_check_branch
          %1572 = sbr.rel (%p1570) target = $region100
        $region99: #{tpu_custom_call.1} parent=95 // pred_region
          %s1573 = sand.u32 %s294, 1
          %s1574 = scalar_lea.sflag [#allocation9], %s1573
          %s1575 = sand.u32 %s294, 1
          %s1576 = smul.addr %s1575, 8
          %s1577 = scalar_lea.vmem [#allocation15], %s1576
          %1579 = dma.done %s1574, 128
        $region100: #{tpu_custom_call.1} parent=95 // pred_fallthru
          _
        // Predicated region
        $region101: #{tpu_custom_call.1} parent=95 // pred_check
          %p1580 = pneg %p337
        $region102: #{tpu_custom_call.1} parent=95 // pred_check_branch
          %1582 = sbr.rel (%p1580) target = $region104
        $region103: #{tpu_custom_call.1} parent=95 // pred_region
          %s1583 = sand.u32 %s322, 1
          %s1584 = scalar_lea.sflag [#allocation17], %s1583
          %s1585 = sand.u32 %s322, 1
          %s1586 = smul.addr %s1585, 8
          %s1587 = scalar_lea.vmem [#allocation16], %s1586
          %1589 = dma.done %s1584, 128
        $region104: #{tpu_custom_call.1} parent=95 // pred_fallthru
          _
      $region96: #{tpu_custom_call.1} parent=5 // pred_fallthru
        _
    $region6: #{tpu_custom_call.1} parent=1 // loop_footer
      %s32 = sadd.s32 1, %s28
    $region7: #{tpu_custom_call.1} parent=1 // loop_footer_branch
      %27 = sbr.rel target = $region3
    $region8: #{tpu_custom_call.1} parent=1 // loop_exit
      _
    %1590 = vsyncpa [#allocation8], 1
    %s1591 = scalar_lea.sflag [#allocation8], 1
    %1592 = vsyncpa %s1591, 1
    %1593 = vsyncpa [#allocation11], 1
    %1594 = vsyncpa [#allocation14], 1
    %1595 = vsyncpa [#allocation9], 1
    %s1596 = scalar_lea.sflag [#allocation9], 1
    %1597 = vsyncpa %s1596, 1
    %1598 = vsyncpa [#allocation17], 1
    %s1599 = scalar_lea.sflag [#allocation17], 1
    %1600 = vsyncpa %s1599, 1

</llo_original>
